<compile_context>
chip_gen: v6e
topology: v6e:2x2x1
jax: 0.10.0
libtpu: 0.0.40
codegen_flags: <defaults>
</compile_context>

<pallas_src>
import math
import jax
import jax.numpy as jnp
from jax.experimental import pallas as pl
from jax.experimental.pallas import tpu as pltpu

# ---------------- model config (small, consistent with the module) ----------
BATCH = 2
SEQ = 8
HIDDEN = 32
NUM_HEADS = 4
HEAD_DIM = HIDDEN // NUM_HEADS
LN_EPS = 1e-12
ATTN_SCALE = 1.0 / math.sqrt(HEAD_DIM)


# ---------------- Pallas kernel ---------------------------------------------
def bert_attention_kernel(hs_ref, w_ref, small_ref, out_ref):
    hs = hs_ref[...]                                    # (B*S, H) = (16, 32)
    w = w_ref[...]                                      # (2H, 3H) = (64, 96)
    small = small_ref[...]                              # (8, 3H)  = (8, 96)

    # Tile-aligned unpack of the fused parameter slabs (1 weight DMA, 1 bias DMA).
    wqkv = w[0:HIDDEN, :]                               # (H, 3H)
    wo = w[HIDDEN:2 * HIDDEN, 0:HIDDEN]                 # (H, H)
    bqkv = small[0:1, :]                                # (1, 3H)
    bo = small[1:2, 0:HIDDEN]                           # (1, H)
    gamma = small[2:3, 0:HIDDEN]                        # (1, H)
    beta = small[3:4, 0:HIDDEN]                         # (1, H)

    # Fused QKV projection (1/sqrt(head_dim) pre-folded into the q columns).
    qkv = jnp.dot(hs, wqkv, preferred_element_type=jnp.float32) + bqkv     # (16, 96)

    # Relayout to head-batched form (B*NH, S, d), built once per tensor in
    # registers from static (tile-aligned row, lane) slices.
    def to_heads(col0):
        parts = []
        for b in range(BATCH):
            for h in range(NUM_HEADS):
                r0 = b * SEQ
                c0 = col0 + h * HEAD_DIM
                parts.append(qkv[r0:r0 + SEQ, c0:c0 + HEAD_DIM])           # (S, d)
        return jnp.stack(parts, axis=0)                                    # (B*NH, S, d)

    q = to_heads(0)
    k = to_heads(HIDDEN)
    v = to_heads(2 * HIDDEN)

    # One stacked NT scores matmul + one stacked softmax over all (batch, head).
    scores = jnp.einsum("bqd,bkd->bqk", q, k,
                        preferred_element_type=jnp.float32)                # (B*NH, S, S)
    scores = scores - jnp.max(scores, axis=-1, keepdims=True)
    e = jnp.exp(scores)
    denom = jnp.sum(e, axis=-1, keepdims=True)
    probs = e * pl.reciprocal(denom, approx=False)      # exact; EUP slot is idle anyway

    ctx = jnp.einsum("bqk,bkd->bqd", probs, v,
                     preferred_element_type=jnp.float32)                   # (B*NH, S, d)

    # Head concat (permute(0,2,1,3)+view) assembled in registers: no VMEM
    # scratch, no masked stores, one value feeding the output matmul.
    ctx2d = jnp.concatenate(
        [jnp.concatenate([ctx[b * NUM_HEADS + h] for h in range(NUM_HEADS)], axis=1)
         for b in range(BATCH)],
        axis=0)                                                            # (B*S, H)

    # BertSelfOutput: dense -> (dropout = identity in eval) -> residual -> LayerNorm.
    x = jnp.dot(ctx2d, wo, preferred_element_type=jnp.float32) + bo + hs
    mu = jnp.mean(x, axis=-1, keepdims=True)
    var = jnp.mean((x - mu) ** 2, axis=-1, keepdims=True)
    y = (x - mu) * jax.lax.rsqrt(var + LN_EPS)
    out_ref[...] = y * gamma + beta                     # single lane-dense store


# ---------------- one-time host-side parameter prep --------------------------
def prep_params(p):
    """Pack all weights into one (2H, 3H) slab and all vectors into one (8, 3H)
    slab; fold the attention scale into Wq/bq."""
    wqkv = jnp.concatenate([p["wq"] * ATTN_SCALE, p["wk"], p["wv"]], axis=1)   # (H, 3H)
    wo_pad = jnp.concatenate(
        [p["wo"], jnp.zeros((HIDDEN, 2 * HIDDEN), jnp.float32)], axis=1)       # (H, 3H)
    w_fused = jnp.concatenate([wqkv, wo_pad], axis=0)                          # (2H, 3H)

    bqkv = jnp.concatenate([p["bq"] * ATTN_SCALE, p["bk"], p["bv"]], axis=1)   # (1, 3H)

    def pad_row(row):  # (1, H) -> (1, 3H)
        return jnp.concatenate([row, jnp.zeros((1, 2 * HIDDEN), jnp.float32)], axis=1)

    small = jnp.concatenate(
        [bqkv, pad_row(p["bo"]), pad_row(p["gamma"]), pad_row(p["beta"]),
         jnp.zeros((4, 3 * HIDDEN), jnp.float32)], axis=0)                     # (8, 3H)

    return {"w_fused": w_fused, "small": small}


# ---------------- wrapper -----------------------------------------------------
def bert_attention(hidden_states, prepped):
    B, S, H = hidden_states.shape
    rows = B * S
    hs2d = hidden_states.reshape(rows, H)

    def full(shape):
        return pl.BlockSpec(shape, lambda i: (0, 0))

    # Single program: whole problem is < 50 KiB of VMEM; grid iteration would
    # only add per-step overhead at this size.
    out2d = pl.pallas_call(
        bert_attention_kernel,
        out_shape=jax.ShapeDtypeStruct((rows, H), jnp.float32),
        grid_spec=pltpu.PrefetchScalarGridSpec(
            num_scalar_prefetch=0,
            grid=(1,),
            in_specs=[full((rows, H)),          # hidden_states slab
                      full((2 * H, 3 * H)),     # fused weights: [wqkv ; wo|0]
                      full((8, 3 * H))],        # fused biases / gamma / beta
            out_specs=full((rows, H)),
        ),
        compiler_params=pltpu.CompilerParams(dimension_semantics=("arbitrary",)),
    )(hs2d, prepped["w_fused"], prepped["small"])

    return out2d.reshape(B, S, H)


# ---------------- pure-JAX reference (for verification) ----------------------
def bert_attention_ref(hs, p):
    B, S, H = hs.shape
    q = hs @ p["wq"] + p["bq"][0]
    k = hs @ p["wk"] + p["bk"][0]
    v = hs @ p["wv"] + p["bv"][0]

    def split(x):  # (B,S,H) -> (B, nh, S, d)
        return x.reshape(B, S, NUM_HEADS, HEAD_DIM).transpose(0, 2, 1, 3)

    qh, kh, vh = split(q), split(k), split(v)
    scores = jnp.einsum("bhld,bhrd->bhlr", qh, kh) * ATTN_SCALE
    probs = jax.nn.softmax(scores, axis=-1)
    ctx = jnp.einsum("bhlr,bhrd->bhld", probs, vh)
    ctx = ctx.transpose(0, 2, 1, 3).reshape(B, S, H)
    x = ctx @ p["wo"] + p["bo"][0] + hs
    mu = x.mean(-1, keepdims=True)
    var = ((x - mu) ** 2).mean(-1, keepdims=True)
    return (x - mu) / jnp.sqrt(var + LN_EPS) * p["gamma"][0] + p["beta"][0]


# ---------------- deterministic parameter init -------------------------------
def init_params(key):
    ks = jax.random.split(key, 8)
    std = 0.02
    return {
        "wq": std * jax.random.normal(ks[0], (HIDDEN, HIDDEN), jnp.float32),
        "wk": std * jax.random.normal(ks[1], (HIDDEN, HIDDEN), jnp.float32),
        "wv": std * jax.random.normal(ks[2], (HIDDEN, HIDDEN), jnp.float32),
        "wo": std * jax.random.normal(ks[3], (HIDDEN, HIDDEN), jnp.float32),
        "bq": std * jax.random.normal(ks[4], (1, HIDDEN), jnp.float32),
        "bk": std * jax.random.normal(ks[5], (1, HIDDEN), jnp.float32),
        "bv": std * jax.random.normal(ks[6], (1, HIDDEN), jnp.float32),
        "bo": std * jax.random.normal(ks[7], (1, HIDDEN), jnp.float32),
        "gamma": jnp.ones((1, HIDDEN), jnp.float32),
        "beta": jnp.zeros((1, HIDDEN), jnp.float32),
    }


if __name__ == "__main__":
    key = jax.random.PRNGKey(0)
    k_in, k_par = jax.random.split(key)
    hidden_states = jax.random.normal(k_in, (BATCH, SEQ, HIDDEN), jnp.float32)
    params = init_params(k_par)
    prepped = prep_params(params)   # one-time host-side transform

    out = bert_attention(hidden_states, prepped)
    out = jax.block_until_ready(out)

    ref = bert_attention_ref(hidden_states, params)
    assert out.shape == (BATCH, SEQ, HIDDEN)
    # Exact softmax reciprocal + f32 matmuls everywhere -> tight tolerance.
    assert jnp.allclose(out, ref, atol=1e-4, rtol=1e-4), "mismatch vs reference"

    print("KERNEL_OK")
</pallas_src>

<mosaic_0001>
module attributes {stable_mosaic.version = 11 : i64} {
  func.func @bert_attention_kernel(%arg0: i32, %arg1: memref<16x32xf32, #tpu.memory_space<vmem>>, %arg2: memref<64x96xf32, #tpu.memory_space<vmem>>, %arg3: memref<8x96xf32, #tpu.memory_space<vmem>>, %arg4: memref<16x32xf32, #tpu.memory_space<vmem>>) attributes {dimension_semantics = [#tpu.dimension_semantics<arbitrary>], iteration_bounds = array<i64: 1>, scalar_prefetch = 0 : i64, scratch_operands = 0 : i64, tpu.core_type = #tpu.core_type<tc>, window_params = [{pipeline_mode = #tpu.pipeline_mode<synchronous>, transform_indices = @transform_0, window_bounds = array<i64: 16, 32>}, {pipeline_mode = #tpu.pipeline_mode<synchronous>, transform_indices = @transform_1, window_bounds = array<i64: 64, 96>}, {pipeline_mode = #tpu.pipeline_mode<synchronous>, transform_indices = @transform_2, window_bounds = array<i64: 8, 96>}, {pipeline_mode = #tpu.pipeline_mode<synchronous>, transform_indices = @transform_3, window_bounds = array<i64: 16, 32>}]} {
    %c0 = arith.constant 0 : index
    %c0_0 = arith.constant 0 : index
    %0 = vector.load %arg1[%c0, %c0_0] : memref<16x32xf32, #tpu.memory_space<vmem>>, vector<16x32xf32>
    %c0_1 = arith.constant 0 : index
    %c0_2 = arith.constant 0 : index
    %1 = vector.load %arg2[%c0_1, %c0_2] : memref<64x96xf32, #tpu.memory_space<vmem>>, vector<64x96xf32>
    %c0_3 = arith.constant 0 : index
    %c0_4 = arith.constant 0 : index
    %2 = vector.load %arg3[%c0_3, %c0_4] : memref<8x96xf32, #tpu.memory_space<vmem>>, vector<8x96xf32>
    %3 = vector.extract_strided_slice %1 {offsets = [0, 0], sizes = [32, 96], strides = [1, 1]} : vector<64x96xf32> to vector<32x96xf32>
    %4 = vector.extract_strided_slice %1 {offsets = [32, 0], sizes = [32, 32], strides = [1, 1]} : vector<64x96xf32> to vector<32x32xf32>
    %5 = vector.extract_strided_slice %2 {offsets = [0, 0], sizes = [1, 96], strides = [1, 1]} : vector<8x96xf32> to vector<1x96xf32>
    %6 = vector.extract_strided_slice %2 {offsets = [1, 0], sizes = [1, 32], strides = [1, 1]} : vector<8x96xf32> to vector<1x32xf32>
    %7 = vector.extract_strided_slice %2 {offsets = [2, 0], sizes = [1, 32], strides = [1, 1]} : vector<8x96xf32> to vector<1x32xf32>
    %8 = vector.extract_strided_slice %2 {offsets = [3, 0], sizes = [1, 32], strides = [1, 1]} : vector<8x96xf32> to vector<1x32xf32>
    %cst = arith.constant dense<0.000000e+00> : vector<16x96xf32>
    %9 = tpu.matmul %0, %3, %cst {dimension_numbers = #tpu.dot_dimension_numbers<[1], [0], [0], [1], [0, 0, 1, 1], [], []>} : vector<16x32xf32>, vector<32x96xf32>, vector<16x96xf32> -> vector<16x96xf32>
    %10 = vector.broadcast %5 : vector<1x96xf32> to vector<16x96xf32>
    %11 = arith.addf %9, %10 : vector<16x96xf32>
    %12 = vector.extract_strided_slice %11 {offsets = [0, 0], sizes = [8, 8], strides = [1, 1]} : vector<16x96xf32> to vector<8x8xf32>
    %13 = vector.extract_strided_slice %11 {offsets = [0, 8], sizes = [8, 8], strides = [1, 1]} : vector<16x96xf32> to vector<8x8xf32>
    %14 = vector.extract_strided_slice %11 {offsets = [0, 16], sizes = [8, 8], strides = [1, 1]} : vector<16x96xf32> to vector<8x8xf32>
    %15 = vector.extract_strided_slice %11 {offsets = [0, 24], sizes = [8, 8], strides = [1, 1]} : vector<16x96xf32> to vector<8x8xf32>
    %16 = vector.extract_strided_slice %11 {offsets = [8, 0], sizes = [8, 8], strides = [1, 1]} : vector<16x96xf32> to vector<8x8xf32>
    %17 = vector.extract_strided_slice %11 {offsets = [8, 8], sizes = [8, 8], strides = [1, 1]} : vector<16x96xf32> to vector<8x8xf32>
    %18 = vector.extract_strided_slice %11 {offsets = [8, 16], sizes = [8, 8], strides = [1, 1]} : vector<16x96xf32> to vector<8x8xf32>
    %19 = vector.extract_strided_slice %11 {offsets = [8, 24], sizes = [8, 8], strides = [1, 1]} : vector<16x96xf32> to vector<8x8xf32>
    %20 = vector.shape_cast %12 : vector<8x8xf32> to vector<1x8x8xf32>
    %21 = vector.shape_cast %13 : vector<8x8xf32> to vector<1x8x8xf32>
    %22 = vector.shape_cast %14 : vector<8x8xf32> to vector<1x8x8xf32>
    %23 = vector.shape_cast %15 : vector<8x8xf32> to vector<1x8x8xf32>
    %24 = vector.shape_cast %16 : vector<8x8xf32> to vector<1x8x8xf32>
    %25 = vector.shape_cast %17 : vector<8x8xf32> to vector<1x8x8xf32>
    %26 = vector.shape_cast %18 : vector<8x8xf32> to vector<1x8x8xf32>
    %27 = vector.shape_cast %19 : vector<8x8xf32> to vector<1x8x8xf32>
    %28 = tpu.concatenate %20, %21, %22, %23, %24, %25, %26, %27 in 0 : vector<1x8x8xf32>, vector<1x8x8xf32>, vector<1x8x8xf32>, vector<1x8x8xf32>, vector<1x8x8xf32>, vector<1x8x8xf32>, vector<1x8x8xf32>, vector<1x8x8xf32> -> vector<8x8x8xf32>
    %29 = vector.extract_strided_slice %11 {offsets = [0, 32], sizes = [8, 8], strides = [1, 1]} : vector<16x96xf32> to vector<8x8xf32>
    %30 = vector.extract_strided_slice %11 {offsets = [0, 40], sizes = [8, 8], strides = [1, 1]} : vector<16x96xf32> to vector<8x8xf32>
    %31 = vector.extract_strided_slice %11 {offsets = [0, 48], sizes = [8, 8], strides = [1, 1]} : vector<16x96xf32> to vector<8x8xf32>
    %32 = vector.extract_strided_slice %11 {offsets = [0, 56], sizes = [8, 8], strides = [1, 1]} : vector<16x96xf32> to vector<8x8xf32>
    %33 = vector.extract_strided_slice %11 {offsets = [8, 32], sizes = [8, 8], strides = [1, 1]} : vector<16x96xf32> to vector<8x8xf32>
    %34 = vector.extract_strided_slice %11 {offsets = [8, 40], sizes = [8, 8], strides = [1, 1]} : vector<16x96xf32> to vector<8x8xf32>
    %35 = vector.extract_strided_slice %11 {offsets = [8, 48], sizes = [8, 8], strides = [1, 1]} : vector<16x96xf32> to vector<8x8xf32>
    %36 = vector.extract_strided_slice %11 {offsets = [8, 56], sizes = [8, 8], strides = [1, 1]} : vector<16x96xf32> to vector<8x8xf32>
    %37 = vector.shape_cast %29 : vector<8x8xf32> to vector<1x8x8xf32>
    %38 = vector.shape_cast %30 : vector<8x8xf32> to vector<1x8x8xf32>
    %39 = vector.shape_cast %31 : vector<8x8xf32> to vector<1x8x8xf32>
    %40 = vector.shape_cast %32 : vector<8x8xf32> to vector<1x8x8xf32>
    %41 = vector.shape_cast %33 : vector<8x8xf32> to vector<1x8x8xf32>
    %42 = vector.shape_cast %34 : vector<8x8xf32> to vector<1x8x8xf32>
    %43 = vector.shape_cast %35 : vector<8x8xf32> to vector<1x8x8xf32>
    %44 = vector.shape_cast %36 : vector<8x8xf32> to vector<1x8x8xf32>
    %45 = tpu.concatenate %37, %38, %39, %40, %41, %42, %43, %44 in 0 : vector<1x8x8xf32>, vector<1x8x8xf32>, vector<1x8x8xf32>, vector<1x8x8xf32>, vector<1x8x8xf32>, vector<1x8x8xf32>, vector<1x8x8xf32>, vector<1x8x8xf32> -> vector<8x8x8xf32>
    %46 = vector.extract_strided_slice %11 {offsets = [0, 64], sizes = [8, 8], strides = [1, 1]} : vector<16x96xf32> to vector<8x8xf32>
    %47 = vector.extract_strided_slice %11 {offsets = [0, 72], sizes = [8, 8], strides = [1, 1]} : vector<16x96xf32> to vector<8x8xf32>
    %48 = vector.extract_strided_slice %11 {offsets = [0, 80], sizes = [8, 8], strides = [1, 1]} : vector<16x96xf32> to vector<8x8xf32>
    %49 = vector.extract_strided_slice %11 {offsets = [0, 88], sizes = [8, 8], strides = [1, 1]} : vector<16x96xf32> to vector<8x8xf32>
    %50 = vector.extract_strided_slice %11 {offsets = [8, 64], sizes = [8, 8], strides = [1, 1]} : vector<16x96xf32> to vector<8x8xf32>
    %51 = vector.extract_strided_slice %11 {offsets = [8, 72], sizes = [8, 8], strides = [1, 1]} : vector<16x96xf32> to vector<8x8xf32>
    %52 = vector.extract_strided_slice %11 {offsets = [8, 80], sizes = [8, 8], strides = [1, 1]} : vector<16x96xf32> to vector<8x8xf32>
    %53 = vector.extract_strided_slice %11 {offsets = [8, 88], sizes = [8, 8], strides = [1, 1]} : vector<16x96xf32> to vector<8x8xf32>
    %54 = vector.shape_cast %46 : vector<8x8xf32> to vector<1x8x8xf32>
    %55 = vector.shape_cast %47 : vector<8x8xf32> to vector<1x8x8xf32>
    %56 = vector.shape_cast %48 : vector<8x8xf32> to vector<1x8x8xf32>
    %57 = vector.shape_cast %49 : vector<8x8xf32> to vector<1x8x8xf32>
    %58 = vector.shape_cast %50 : vector<8x8xf32> to vector<1x8x8xf32>
    %59 = vector.shape_cast %51 : vector<8x8xf32> to vector<1x8x8xf32>
    %60 = vector.shape_cast %52 : vector<8x8xf32> to vector<1x8x8xf32>
    %61 = vector.shape_cast %53 : vector<8x8xf32> to vector<1x8x8xf32>
    %62 = tpu.concatenate %54, %55, %56, %57, %58, %59, %60, %61 in 0 : vector<1x8x8xf32>, vector<1x8x8xf32>, vector<1x8x8xf32>, vector<1x8x8xf32>, vector<1x8x8xf32>, vector<1x8x8xf32>, vector<1x8x8xf32>, vector<1x8x8xf32> -> vector<8x8x8xf32>
    "tpu.trace_start"() <{level = 10 : i32, message = "bqd,bkd->bqk"}> : () -> ()
    %cst_5 = arith.constant dense<0.000000e+00> : vector<8x8x8xf32>
    %63 = tpu.matmul %28, %45, %cst_5 {dimension_numbers = #tpu.dot_dimension_numbers<[2], [2], [1], [1], [0, 0, 0, 1, 1, 1], [0], [0]>} : vector<8x8x8xf32>, vector<8x8x8xf32>, vector<8x8x8xf32> -> vector<8x8x8xf32>
    "tpu.trace_stop"() : () -> ()
    %cst_6 = arith.constant dense<0xFF800000> : vector<8x8xf32>
    %64 = vector.multi_reduction <maximumf>, %63, %cst_6 [2] : vector<8x8x8xf32> to vector<8x8xf32>
    %65 = vector.shape_cast %64 : vector<8x8xf32> to vector<8x8x1xf32>
    %66 = vector.broadcast %65 : vector<8x8x1xf32> to vector<8x8x8xf32>
    %67 = arith.subf %63, %66 : vector<8x8x8xf32>
    %68 = math.exp %67 : vector<8x8x8xf32>
    %cst_7 = arith.constant dense<0.000000e+00> : vector<8x8xf32>
    %69 = vector.multi_reduction <add>, %68, %cst_7 [2] : vector<8x8x8xf32> to vector<8x8xf32>
    %70 = vector.shape_cast %69 : vector<8x8xf32> to vector<8x8x1xf32>
    %71 = tpu.reciprocal %70 : vector<8x8x1xf32> -> vector<8x8x1xf32>
    %72 = vector.broadcast %71 : vector<8x8x1xf32> to vector<8x8x8xf32>
    %73 = arith.mulf %68, %72 : vector<8x8x8xf32>
    "tpu.trace_start"() <{level = 10 : i32, message = "bqk,bkd->bqd"}> : () -> ()
    %cst_8 = arith.constant dense<0.000000e+00> : vector<8x8x8xf32>
    %74 = tpu.matmul %73, %62, %cst_8 {dimension_numbers = #tpu.dot_dimension_numbers<[2], [1], [1], [2], [0, 0, 0, 1, 1, 2], [0], [0]>} : vector<8x8x8xf32>, vector<8x8x8xf32>, vector<8x8x8xf32> -> vector<8x8x8xf32>
    "tpu.trace_stop"() : () -> ()
    %75 = vector.extract_strided_slice %74 {offsets = [0, 0, 0], sizes = [1, 8, 8], strides = [1, 1, 1]} : vector<8x8x8xf32> to vector<1x8x8xf32>
    %76 = vector.shape_cast %75 : vector<1x8x8xf32> to vector<8x8xf32>
    %77 = vector.extract_strided_slice %74 {offsets = [1, 0, 0], sizes = [1, 8, 8], strides = [1, 1, 1]} : vector<8x8x8xf32> to vector<1x8x8xf32>
    %78 = vector.shape_cast %77 : vector<1x8x8xf32> to vector<8x8xf32>
    %79 = vector.extract_strided_slice %74 {offsets = [2, 0, 0], sizes = [1, 8, 8], strides = [1, 1, 1]} : vector<8x8x8xf32> to vector<1x8x8xf32>
    %80 = vector.shape_cast %79 : vector<1x8x8xf32> to vector<8x8xf32>
    %81 = vector.extract_strided_slice %74 {offsets = [3, 0, 0], sizes = [1, 8, 8], strides = [1, 1, 1]} : vector<8x8x8xf32> to vector<1x8x8xf32>
    %82 = vector.shape_cast %81 : vector<1x8x8xf32> to vector<8x8xf32>
    %83 = tpu.concatenate %76, %78, %80, %82 in 1 : vector<8x8xf32>, vector<8x8xf32>, vector<8x8xf32>, vector<8x8xf32> -> vector<8x32xf32>
    %84 = vector.extract_strided_slice %74 {offsets = [4, 0, 0], sizes = [1, 8, 8], strides = [1, 1, 1]} : vector<8x8x8xf32> to vector<1x8x8xf32>
    %85 = vector.shape_cast %84 : vector<1x8x8xf32> to vector<8x8xf32>
    %86 = vector.extract_strided_slice %74 {offsets = [5, 0, 0], sizes = [1, 8, 8], strides = [1, 1, 1]} : vector<8x8x8xf32> to vector<1x8x8xf32>
    %87 = vector.shape_cast %86 : vector<1x8x8xf32> to vector<8x8xf32>
    %88 = vector.extract_strided_slice %74 {offsets = [6, 0, 0], sizes = [1, 8, 8], strides = [1, 1, 1]} : vector<8x8x8xf32> to vector<1x8x8xf32>
    %89 = vector.shape_cast %88 : vector<1x8x8xf32> to vector<8x8xf32>
    %90 = vector.extract_strided_slice %74 {offsets = [7, 0, 0], sizes = [1, 8, 8], strides = [1, 1, 1]} : vector<8x8x8xf32> to vector<1x8x8xf32>
    %91 = vector.shape_cast %90 : vector<1x8x8xf32> to vector<8x8xf32>
    %92 = tpu.concatenate %85, %87, %89, %91 in 1 : vector<8x8xf32>, vector<8x8xf32>, vector<8x8xf32>, vector<8x8xf32> -> vector<8x32xf32>
    %93 = tpu.concatenate %83, %92 in 0 : vector<8x32xf32>, vector<8x32xf32> -> vector<16x32xf32>
    %cst_9 = arith.constant dense<0.000000e+00> : vector<16x32xf32>
    %94 = tpu.matmul %93, %4, %cst_9 {dimension_numbers = #tpu.dot_dimension_numbers<[1], [0], [0], [1], [0, 0, 1, 1], [], []>} : vector<16x32xf32>, vector<32x32xf32>, vector<16x32xf32> -> vector<16x32xf32>
    %95 = vector.broadcast %6 : vector<1x32xf32> to vector<16x32xf32>
    %96 = arith.addf %94, %95 : vector<16x32xf32>
    %97 = arith.addf %96, %0 : vector<16x32xf32>
    %cst_10 = arith.constant dense<0.000000e+00> : vector<16xf32>
    %98 = vector.multi_reduction <add>, %97, %cst_10 [1] : vector<16x32xf32> to vector<16xf32>
    %99 = vector.shape_cast %98 : vector<16xf32> to vector<16x1xf32>
    %cst_11 = arith.constant 3.200000e+01 : f32
    %100 = vector.broadcast %cst_11 : f32 to vector<16x1xf32>
    %101 = arith.divf %99, %100 : vector<16x1xf32>
    %102 = vector.broadcast %101 : vector<16x1xf32> to vector<16x32xf32>
    %103 = arith.subf %97, %102 : vector<16x32xf32>
    %104 = arith.mulf %103, %103 : vector<16x32xf32>
    %cst_12 = arith.constant dense<0.000000e+00> : vector<16xf32>
    %105 = vector.multi_reduction <add>, %104, %cst_12 [1] : vector<16x32xf32> to vector<16xf32>
    %106 = vector.shape_cast %105 : vector<16xf32> to vector<16x1xf32>
    %cst_13 = arith.constant 3.200000e+01 : f32
    %107 = vector.broadcast %cst_13 : f32 to vector<16x1xf32>
    %108 = arith.divf %106, %107 : vector<16x1xf32>
    %109 = vector.broadcast %101 : vector<16x1xf32> to vector<16x32xf32>
    %110 = arith.subf %97, %109 : vector<16x32xf32>
    %cst_14 = arith.constant 9.99999996E-13 : f32
    %111 = vector.broadcast %cst_14 : f32 to vector<16x1xf32>
    %112 = arith.addf %108, %111 : vector<16x1xf32>
    %113 = math.rsqrt %112 : vector<16x1xf32>
    %114 = vector.broadcast %113 : vector<16x1xf32> to vector<16x32xf32>
    %115 = arith.mulf %110, %114 : vector<16x32xf32>
    %116 = vector.broadcast %7 : vector<1x32xf32> to vector<16x32xf32>
    %117 = arith.mulf %115, %116 : vector<16x32xf32>
    %118 = vector.broadcast %8 : vector<1x32xf32> to vector<16x32xf32>
    %119 = arith.addf %117, %118 : vector<16x32xf32>
    %c0_15 = arith.constant 0 : index
    %c0_16 = arith.constant 0 : index
    %120 = vector.load %arg4[%c0_15, %c0_16] : memref<16x32xf32, #tpu.memory_space<vmem>>, vector<16x32xf32>
    tpu.vector_store %arg4[%c0_15, %c0_16], %119 {strides = array<i32>} : memref<16x32xf32, #tpu.memory_space<vmem>>, vector<16x32xf32>,
    return
  }
  func.func @transform_0(%arg0: i32) -> (i32, i32) {
    %c0_i32 = arith.constant 0 : i32
    %c0_i32_0 = arith.constant 0 : i32
    %c0_i32_1 = arith.constant 0 : i32
    return %c0_i32, %c0_i32_0 : i32, i32
  }
  func.func @transform_1(%arg0: i32) -> (i32, i32) {
    %c0_i32 = arith.constant 0 : i32
    %c0_i32_0 = arith.constant 0 : i32
    %c0_i32_1 = arith.constant 0 : i32
    return %c0_i32, %c0_i32_0 : i32, i32
  }
  func.func @transform_2(%arg0: i32) -> (i32, i32) {
    %c0_i32 = arith.constant 0 : i32
    %c0_i32_0 = arith.constant 0 : i32
    %c0_i32_1 = arith.constant 0 : i32
    return %c0_i32, %c0_i32_0 : i32, i32
  }
  func.func @transform_3(%arg0: i32) -> (i32, i32) {
    %c0_i32 = arith.constant 0 : i32
    %c0_i32_0 = arith.constant 0 : i32
    %c0_i32_1 = arith.constant 0 : i32
    return %c0_i32, %c0_i32_0 : i32, i32
  }
}

</mosaic_0001>

<llo_original>
// kernel: tpu_custom_call.1
$region0: #{tpu_custom_call.1}
  #allocation0 [shape = 'u32[]', space=smem, size = 0x4, offset = 0x4, fixed_abs, tag = 'smem constant byte address 0x4 - core index']
  #allocation1 [shape = 'u32[144,128]{1,0:T(1,128)}', space=vmem, size = 0x12000, scoped, tag = 'internal scratch']
  %s0 = inlined_call_operand.hbm [shape: f32[16,32], index: 0, kind: input, shape index: {}]
  %s1 = inlined_call_operand.hbm [shape: f32[64,96], index: 1, kind: input, shape index: {}]
  %s2 = inlined_call_operand.hbm [shape: f32[8,96], index: 2, kind: input, shape index: {}]
  %s3 = inlined_call_operand.hbm [shape: f32[16,32], index: 3, kind: output, shape index: {}]
  %s4 = sld [smem:[#allocation0]]
  $region34: #{tpu_custom_call.1} parent=0
    _
  %s6 = ssub.s32 1, %s4
  %s7 = scalar_select 0, %s6, %s4
  $region1: #{tpu_custom_call.1} parent=0
    #allocation2 [shape = 'u8[8192]{0}', space=vmem, size = 0x2000, scoped, tag = 'input window, operand 0, single buffered']
    #allocation3 [shape = 's32[1]{0}', space=sflag, size = 0x4, scoped, tag = 'scoped memory for tpu_custom_call.1']
    #allocation4 [shape = 's32[1]{0}', space=sflag, size = 0x4, scoped, tag = 'scoped memory for tpu_custom_call.1']
    #allocation5 [shape = 'u8[32768]{0}', space=vmem, size = 0x8000, scoped, tag = 'input window, operand 1, single buffered']
    #allocation6 [shape = 's32[1]{0}', space=sflag, size = 0x4, scoped, tag = 'scoped memory for tpu_custom_call.1']
    #allocation7 [shape = 'u8[4096]{0}', space=vmem, size = 0x1000, scoped, tag = 'input window, operand 2, single buffered']
    #allocation8 [shape = 'u8[8192]{0}', space=vmem, size = 0x2000, scoped, tag = 'output window, operand 0, single buffered']
    %8 = vsyncpa [#allocation3], 0
    %9 = vsyncpa [#allocation6], 0
    %10 = vsyncpa [#allocation4], 0
    // Predicated region
    $region2: #{tpu_custom_call.1} parent=1 // pred_check
      _
    $region3: #{tpu_custom_call.1} parent=1 // pred_check_branch
      %12 = sbr.rel (0) target = $region5
    $region4: #{tpu_custom_call.1} parent=1 // pred_region
      %s14 = ssub.s32 256, 256
      %15 = vsyncadd [#allocation3], %s14
      %s16 = sshll.u32 [#allocation2], 4
      %s17 = int_to_ptr.vmem [resolvable:$true] %s16
      %22 = dma.hbm_to_vmem [thread:$0]  %s0, 256, %s17, [#allocation3], 128, 128, 8
    $region5: #{tpu_custom_call.1} parent=1 // pred_fallthru
      _
    // Predicated region
    $region6: #{tpu_custom_call.1} parent=1 // pred_check
      _
    $region7: #{tpu_custom_call.1} parent=1 // pred_check_branch
      %24 = sbr.rel (0) target = $region9
    $region8: #{tpu_custom_call.1} parent=1 // pred_region
      %s26 = ssub.s32 1024, 1024
      %27 = vsyncadd [#allocation6], %s26
      %s28 = sshll.u32 [#allocation5], 4
      %s29 = int_to_ptr.vmem [resolvable:$true] %s28
      %34 = dma.hbm_to_vmem [thread:$0]  %s1, 1024, %s29, [#allocation6], 128, 128, 8
    $region9: #{tpu_custom_call.1} parent=1 // pred_fallthru
      _
    // Predicated region
    $region10: #{tpu_custom_call.1} parent=1 // pred_check
      _
    $region11: #{tpu_custom_call.1} parent=1 // pred_check_branch
      %36 = sbr.rel (0) target = $region13
    $region12: #{tpu_custom_call.1} parent=1 // pred_region
      %s38 = ssub.s32 128, 128
      %39 = vsyncadd [#allocation6], %s38
      %s41 = sshll.u32 [#allocation7], 4
      %s42 = int_to_ptr.vmem [resolvable:$true] %s41
      %44 = dma.hbm_to_vmem [thread:$0]  %s2, 128, %s42, [#allocation6]
    $region13: #{tpu_custom_call.1} parent=1 // pred_fallthru
      _
    // Predicated region
    $region14: #{tpu_custom_call.1} parent=1 // pred_check
      _
    $region15: #{tpu_custom_call.1} parent=1 // pred_check_branch
      %46 = sbr.rel (0) target = $region17
    $region16: #{tpu_custom_call.1} parent=1 // pred_region
      %47 = dma.done [#allocation3], 256
    $region17: #{tpu_custom_call.1} parent=1 // pred_fallthru
      _
    // Predicated region
    $region18: #{tpu_custom_call.1} parent=1 // pred_check
      _
    $region19: #{tpu_custom_call.1} parent=1 // pred_check_branch
      %49 = sbr.rel (0) target = $region21
    $region20: #{tpu_custom_call.1} parent=1 // pred_region
      %50 = dma.done [#allocation6], 1024
    $region21: #{tpu_custom_call.1} parent=1 // pred_fallthru
      _
    // Predicated region
    $region22: #{tpu_custom_call.1} parent=1 // pred_check
      _
    $region23: #{tpu_custom_call.1} parent=1 // pred_check_branch
      %52 = sbr.rel (0) target = $region25
    $region24: #{tpu_custom_call.1} parent=1 // pred_region
      %53 = dma.done [#allocation6], 128
    $region25: #{tpu_custom_call.1} parent=1 // pred_fallthru
      _
    %v54 = vld [vmem:[#allocation2] sm:$0xff]
    %v55 = vld [vmem:[#allocation2 + $0x8] sm:$0xff]
    %v56 = vld [vmem:[#allocation5] sm:$0xff]
    %v57 = vld [vmem:[#allocation5 + $0x8] sm:$0xff]
    %v58 = vld [vmem:[#allocation5 + $0x10] sm:$0xff]
    %v59 = vld [vmem:[#allocation5 + $0x18] sm:$0xff]
    %v60 = vld [vmem:[#allocation5 + $0x20] sm:$0xff]
    %v61 = vld [vmem:[#allocation5 + $0x28] sm:$0xff]
    %v62 = vld [vmem:[#allocation5 + $0x30] sm:$0xff]
    %v63 = vld [vmem:[#allocation5 + $0x38] sm:$0xff]
    %v64 = vld [vmem:[#allocation7] sm:$0xff]
    %v65 = vlaneseq
    %v66 = vshrl.u32 %v65, 7
    %v67 = vsub.s32 0, %v66
    %v68 = vrot.slane %v64, %v67
    %vm69 = vcmask 261120
    %v71 = vsel %vm69, %v54, 0
    %v74 = vsel %vm69, %v55, 0
    %76 = vmatprep.subr.mxu0 0.0
    %77 = vmatpush1.msra.mxu0 0.0
    %78 = vmatprep.subr.mxu0 0.0
    %79 = vmatpush1.msra.mxu0 0.0
    %80 = vmatprep.subr.mxu0 0.0
    %81 = vmatpush1.msra.mxu0 0.0
    %82 = vmatprep.subr.mxu0 0.0
    %83 = vmatpush1.msra.mxu0 0.0
    %84 = vmatprep.subr.mxu0 0.0
    %85 = vmatpush1.msra.mxu0 0.0
    %86 = vmatprep.subr.mxu0 0.0
    %87 = vmatpush1.msra.mxu0 0.0
    %88 = vmatprep.subr.mxu0 0.0
    %89 = vmatpush1.msra.mxu0 0.0
    %90 = vmatprep.subr.mxu0 0.0
    %91 = vmatpush1.msra.mxu0 0.0
    %92 = vmatprep.subr.mxu0 0.0
    %93 = vmatpush1.msra.mxu0 0.0
    %94 = vmatprep.subr.mxu0 0.0
    %95 = vmatpush1.msra.mxu0 0.0
    %96 = vmatprep.subr.mxu0 0.0
    %97 = vmatpush1.msra.mxu0 0.0
    %98 = vmatprep.subr.mxu0 0.0
    %99 = vmatpush1.msra.mxu0 0.0
    %100 = vmatprep.subr.mxu0 0.0
    %101 = vmatpush1.msra.mxu0 %v59
    %102 = vmatprep.subr.mxu0 0.0
    %103 = vmatpush1.msra.mxu0 %v58
    %104 = vmatprep.subr.mxu0 0.0
    %105 = vmatpush1.msra.mxu0 %v57
    %106 = vmatprep.subr.mxu0 0.0
    %107 = vmatpush1.msra.mxu0 %v56
    %108 = vmatprep.subr.mxu0 0.0
    %109 = vmatpush2.msra.mxu0 0.0
    %110 = vmatprep.subr.mxu0 0.0
    %111 = vmatpush2.msra.mxu0 0.0
    %112 = vmatprep.subr.mxu0 0.0
    %113 = vmatpush2.msra.mxu0 0.0
    %114 = vmatprep.subr.mxu0 0.0
    %115 = vmatpush2.msra.mxu0 0.0
    %116 = vmatprep.subr.mxu0 0.0
    %117 = vmatpush2.msra.mxu0 0.0
    %118 = vmatprep.subr.mxu0 0.0
    %119 = vmatpush2.msra.mxu0 0.0
    %120 = vmatprep.subr.mxu0 0.0
    %121 = vmatpush2.msra.mxu0 0.0
    %122 = vmatprep.subr.mxu0 0.0
    %123 = vmatpush2.msra.mxu0 0.0
    %124 = vmatprep.subr.mxu0 0.0
    %125 = vmatpush2.msra.mxu0 0.0
    %126 = vmatprep.subr.mxu0 0.0
    %127 = vmatpush2.msra.mxu0 0.0
    %128 = vmatprep.subr.mxu0 0.0
    %129 = vmatpush2.msra.mxu0 0.0
    %130 = vmatprep.subr.mxu0 0.0
    %131 = vmatpush2.msra.mxu0 0.0
    %132 = vmatprep.subr.mxu0 0.0
    %133 = vmatpush2.msra.mxu0 0.0
    %134 = vmatprep.subr.mxu0 0.0
    %135 = vmatpush2.msra.mxu0 0.0
    %136 = vmatprep.subr.mxu0 0.0
    %137 = vmatpush2.msra.mxu0 0.0
    %138 = vmatprep.subr.mxu0 0.0
    %139 = vmatpush2.msra.mxu0 0.0
    %140 = vmatprep.mubr.f32.mxu0 0.0
    %141 = vmatmul.mubr.f32.gmra.mxu0 %v71
    %v142 = vpop.f32.mrf.mxu0
    %v143 = vadd.f32 %v68, %v142
    %v144 = vpop.f32.mrf.mxu0
    %145 = vmatprep.mubr.f32.mxu0 0.0
    %146 = vmatmul.mubr.f32.gmra.mxu0 %v74
    %v147 = vpop.f32.mrf.mxu0
    %v148 = vadd.f32 %v68, %v147
    %v149 = vpop.f32.mrf.mxu0
    %150 = vdwg.mxu0
    %152 = vrot.lane.b32.xlu0 %v143, 120
    %v153 = vpop.permute.xlu0 %152
    %154 = vrot.lane.b32.xlu0 %v143, 112
    %v155 = vpop.permute.xlu0 %154
    %156 = vrot.lane.b32.xlu0 %v143, 104
    %v157 = vpop.permute.xlu0 %156
    %159 = vrot.lane.b32.xlu0 %v148, 120
    %v160 = vpop.permute.xlu0 %159
    %161 = vrot.lane.b32.xlu0 %v148, 112
    %v162 = vpop.permute.xlu0 %161
    %163 = vrot.lane.b32.xlu0 %v148, 104
    %v164 = vpop.permute.xlu0 %163
    %165 = vrot.lane.b32.xlu0 %v143, 96
    %v166 = vpop.permute.xlu0 %165
    %vm167 = vcmask 64512
    %v168 = vsel %vm167, %v143, 0
    %v170 = vsel %vm167, %v166, 0
    %172 = vmatprep.subr.mxu0 0.0
    %173 = vmatpush1.xpose.msra.mxu0 0.0
    %174 = vmatprep.subr.mxu0 0.0
    %175 = vmatpush1.xpose.msra.mxu0 0.0
    %176 = vmatprep.subr.mxu0 0.0
    %177 = vmatpush1.xpose.msra.mxu0 0.0
    %178 = vmatprep.subr.mxu0 0.0
    %179 = vmatpush1.xpose.msra.mxu0 0.0
    %180 = vmatprep.subr.mxu0 0.0
    %181 = vmatpush1.xpose.msra.mxu0 0.0
    %182 = vmatprep.subr.mxu0 0.0
    %183 = vmatpush1.xpose.msra.mxu0 0.0
    %184 = vmatprep.subr.mxu0 0.0
    %185 = vmatpush1.xpose.msra.mxu0 0.0
    %186 = vmatprep.subr.mxu0 0.0
    %187 = vmatpush1.xpose.msra.mxu0 0.0
    %188 = vmatprep.subr.mxu0 0.0
    %189 = vmatpush1.xpose.msra.mxu0 0.0
    %190 = vmatprep.subr.mxu0 0.0
    %191 = vmatpush1.xpose.msra.mxu0 0.0
    %192 = vmatprep.subr.mxu0 0.0
    %193 = vmatpush1.xpose.msra.mxu0 0.0
    %194 = vmatprep.subr.mxu0 0.0
    %195 = vmatpush1.xpose.msra.mxu0 0.0
    %196 = vmatprep.subr.mxu0 0.0
    %197 = vmatpush1.xpose.msra.mxu0 0.0
    %198 = vmatprep.subr.mxu0 0.0
    %199 = vmatpush1.xpose.msra.mxu0 0.0
    %200 = vmatprep.subr.mxu0 0.0
    %201 = vmatpush1.xpose.msra.mxu0 0.0
    %202 = vmatprep.subr.mxu0 0.0
    %203 = vmatpush1.xpose.msra.mxu0 %v170
    %204 = vmatprep.subr.mxu0 0.0
    %205 = vmatpush2.xpose.msra.mxu0 0.0
    %206 = vmatprep.subr.mxu0 0.0
    %207 = vmatpush2.xpose.msra.mxu0 0.0
    %208 = vmatprep.subr.mxu0 0.0
    %209 = vmatpush2.xpose.msra.mxu0 0.0
    %210 = vmatprep.subr.mxu0 0.0
    %211 = vmatpush2.xpose.msra.mxu0 0.0
    %212 = vmatprep.subr.mxu0 0.0
    %213 = vmatpush2.xpose.msra.mxu0 0.0
    %214 = vmatprep.subr.mxu0 0.0
    %215 = vmatpush2.xpose.msra.mxu0 0.0
    %216 = vmatprep.subr.mxu0 0.0
    %217 = vmatpush2.xpose.msra.mxu0 0.0
    %218 = vmatprep.subr.mxu0 0.0
    %219 = vmatpush2.xpose.msra.mxu0 0.0
    %220 = vmatprep.subr.mxu0 0.0
    %221 = vmatpush2.xpose.msra.mxu0 0.0
    %222 = vmatprep.subr.mxu0 0.0
    %223 = vmatpush2.xpose.msra.mxu0 0.0
    %224 = vmatprep.subr.mxu0 0.0
    %225 = vmatpush2.xpose.msra.mxu0 0.0
    %226 = vmatprep.subr.mxu0 0.0
    %227 = vmatpush2.xpose.msra.mxu0 0.0
    %228 = vmatprep.subr.mxu0 0.0
    %229 = vmatpush2.xpose.msra.mxu0 0.0
    %230 = vmatprep.subr.mxu0 0.0
    %231 = vmatpush2.xpose.msra.mxu0 0.0
    %232 = vmatprep.subr.mxu0 0.0
    %233 = vmatpush2.xpose.msra.mxu0 0.0
    %234 = vmatprep.subr.mxu0 0.0
    %235 = vmatpush2.xpose.msra.mxu0 0.0
    %236 = vmatprep.mubr.f32.mxu0 0.0
    %237 = vmatmul.mubr.f32.gmra.mxu0 %v168
    %v238 = vpop.f32.mrf.mxu0
    %v239 = vadd.f32 0.0, %v238
    %v240 = vpop.f32.mrf.mxu0
    %241 = vdwg.mxu0
    %242 = vrot.lane.b32.xlu0 %v153, 96
    %v243 = vpop.permute.xlu0 %242
    %v244 = vsel %vm167, %v153, 0
    %v246 = vsel %vm167, %v243, 0
    %248 = vmatprep.subr.mxu0 0.0
    %249 = vmatpush1.xpose.msra.mxu0 0.0
    %250 = vmatprep.subr.mxu0 0.0
    %251 = vmatpush1.xpose.msra.mxu0 0.0
    %252 = vmatprep.subr.mxu0 0.0
    %253 = vmatpush1.xpose.msra.mxu0 0.0
    %254 = vmatprep.subr.mxu0 0.0
    %255 = vmatpush1.xpose.msra.mxu0 0.0
    %256 = vmatprep.subr.mxu0 0.0
    %257 = vmatpush1.xpose.msra.mxu0 0.0
    %258 = vmatprep.subr.mxu0 0.0
    %259 = vmatpush1.xpose.msra.mxu0 0.0
    %260 = vmatprep.subr.mxu0 0.0
    %261 = vmatpush1.xpose.msra.mxu0 0.0
    %262 = vmatprep.subr.mxu0 0.0
    %263 = vmatpush1.xpose.msra.mxu0 0.0
    %264 = vmatprep.subr.mxu0 0.0
    %265 = vmatpush1.xpose.msra.mxu0 0.0
    %266 = vmatprep.subr.mxu0 0.0
    %267 = vmatpush1.xpose.msra.mxu0 0.0
    %268 = vmatprep.subr.mxu0 0.0
    %269 = vmatpush1.xpose.msra.mxu0 0.0
    %270 = vmatprep.subr.mxu0 0.0
    %271 = vmatpush1.xpose.msra.mxu0 0.0
    %272 = vmatprep.subr.mxu0 0.0
    %273 = vmatpush1.xpose.msra.mxu0 0.0
    %274 = vmatprep.subr.mxu0 0.0
    %275 = vmatpush1.xpose.msra.mxu0 0.0
    %276 = vmatprep.subr.mxu0 0.0
    %277 = vmatpush1.xpose.msra.mxu0 0.0
    %278 = vmatprep.subr.mxu0 0.0
    %279 = vmatpush1.xpose.msra.mxu0 %v246
    %280 = vmatprep.subr.mxu0 0.0
    %281 = vmatpush2.xpose.msra.mxu0 0.0
    %282 = vmatprep.subr.mxu0 0.0
    %283 = vmatpush2.xpose.msra.mxu0 0.0
    %284 = vmatprep.subr.mxu0 0.0
    %285 = vmatpush2.xpose.msra.mxu0 0.0
    %286 = vmatprep.subr.mxu0 0.0
    %287 = vmatpush2.xpose.msra.mxu0 0.0
    %288 = vmatprep.subr.mxu0 0.0
    %289 = vmatpush2.xpose.msra.mxu0 0.0
    %290 = vmatprep.subr.mxu0 0.0
    %291 = vmatpush2.xpose.msra.mxu0 0.0
    %292 = vmatprep.subr.mxu0 0.0
    %293 = vmatpush2.xpose.msra.mxu0 0.0
    %294 = vmatprep.subr.mxu0 0.0
    %295 = vmatpush2.xpose.msra.mxu0 0.0
    %296 = vmatprep.subr.mxu0 0.0
    %297 = vmatpush2.xpose.msra.mxu0 0.0
    %298 = vmatprep.subr.mxu0 0.0
    %299 = vmatpush2.xpose.msra.mxu0 0.0
    %300 = vmatprep.subr.mxu0 0.0
    %301 = vmatpush2.xpose.msra.mxu0 0.0
    %302 = vmatprep.subr.mxu0 0.0
    %303 = vmatpush2.xpose.msra.mxu0 0.0
    %304 = vmatprep.subr.mxu0 0.0
    %305 = vmatpush2.xpose.msra.mxu0 0.0
    %306 = vmatprep.subr.mxu0 0.0
    %307 = vmatpush2.xpose.msra.mxu0 0.0
    %308 = vmatprep.subr.mxu0 0.0
    %309 = vmatpush2.xpose.msra.mxu0 0.0
    %310 = vmatprep.subr.mxu0 0.0
    %311 = vmatpush2.xpose.msra.mxu0 0.0
    %312 = vmatprep.mubr.f32.mxu0 0.0
    %313 = vmatmul.mubr.f32.gmra.mxu0 %v244
    %v314 = vpop.f32.mrf.mxu0
    %v315 = vadd.f32 0.0, %v314
    %v316 = vpop.f32.mrf.mxu0
    %317 = vdwg.mxu0
    %318 = vrot.lane.b32.xlu0 %v155, 96
    %v319 = vpop.permute.xlu0 %318
    %v320 = vsel %vm167, %v155, 0
    %v322 = vsel %vm167, %v319, 0
    %324 = vmatprep.subr.mxu0 0.0
    %325 = vmatpush1.xpose.msra.mxu0 0.0
    %326 = vmatprep.subr.mxu0 0.0
    %327 = vmatpush1.xpose.msra.mxu0 0.0
    %328 = vmatprep.subr.mxu0 0.0
    %329 = vmatpush1.xpose.msra.mxu0 0.0
    %330 = vmatprep.subr.mxu0 0.0
    %331 = vmatpush1.xpose.msra.mxu0 0.0
    %332 = vmatprep.subr.mxu0 0.0
    %333 = vmatpush1.xpose.msra.mxu0 0.0
    %334 = vmatprep.subr.mxu0 0.0
    %335 = vmatpush1.xpose.msra.mxu0 0.0
    %336 = vmatprep.subr.mxu0 0.0
    %337 = vmatpush1.xpose.msra.mxu0 0.0
    %338 = vmatprep.subr.mxu0 0.0
    %339 = vmatpush1.xpose.msra.mxu0 0.0
    %340 = vmatprep.subr.mxu0 0.0
    %341 = vmatpush1.xpose.msra.mxu0 0.0
    %342 = vmatprep.subr.mxu0 0.0
    %343 = vmatpush1.xpose.msra.mxu0 0.0
    %344 = vmatprep.subr.mxu0 0.0
    %345 = vmatpush1.xpose.msra.mxu0 0.0
    %346 = vmatprep.subr.mxu0 0.0
    %347 = vmatpush1.xpose.msra.mxu0 0.0
    %348 = vmatprep.subr.mxu0 0.0
    %349 = vmatpush1.xpose.msra.mxu0 0.0
    %350 = vmatprep.subr.mxu0 0.0
    %351 = vmatpush1.xpose.msra.mxu0 0.0
    %352 = vmatprep.subr.mxu0 0.0
    %353 = vmatpush1.xpose.msra.mxu0 0.0
    %354 = vmatprep.subr.mxu0 0.0
    %355 = vmatpush1.xpose.msra.mxu0 %v322
    %356 = vmatprep.subr.mxu0 0.0
    %357 = vmatpush2.xpose.msra.mxu0 0.0
    %358 = vmatprep.subr.mxu0 0.0
    %359 = vmatpush2.xpose.msra.mxu0 0.0
    %360 = vmatprep.subr.mxu0 0.0
    %361 = vmatpush2.xpose.msra.mxu0 0.0
    %362 = vmatprep.subr.mxu0 0.0
    %363 = vmatpush2.xpose.msra.mxu0 0.0
    %364 = vmatprep.subr.mxu0 0.0
    %365 = vmatpush2.xpose.msra.mxu0 0.0
    %366 = vmatprep.subr.mxu0 0.0
    %367 = vmatpush2.xpose.msra.mxu0 0.0
    %368 = vmatprep.subr.mxu0 0.0
    %369 = vmatpush2.xpose.msra.mxu0 0.0
    %370 = vmatprep.subr.mxu0 0.0
    %371 = vmatpush2.xpose.msra.mxu0 0.0
    %372 = vmatprep.subr.mxu0 0.0
    %373 = vmatpush2.xpose.msra.mxu0 0.0
    %374 = vmatprep.subr.mxu0 0.0
    %375 = vmatpush2.xpose.msra.mxu0 0.0
    %376 = vmatprep.subr.mxu0 0.0
    %377 = vmatpush2.xpose.msra.mxu0 0.0
    %378 = vmatprep.subr.mxu0 0.0
    %379 = vmatpush2.xpose.msra.mxu0 0.0
    %380 = vmatprep.subr.mxu0 0.0
    %381 = vmatpush2.xpose.msra.mxu0 0.0
    %382 = vmatprep.subr.mxu0 0.0
    %383 = vmatpush2.xpose.msra.mxu0 0.0
    %384 = vmatprep.subr.mxu0 0.0
    %385 = vmatpush2.xpose.msra.mxu0 0.0
    %386 = vmatprep.subr.mxu0 0.0
    %387 = vmatpush2.xpose.msra.mxu0 0.0
    %388 = vmatprep.mubr.f32.mxu0 0.0
    %389 = vmatmul.mubr.f32.gmra.mxu0 %v320
    %v390 = vpop.f32.mrf.mxu0
    %v391 = vadd.f32 0.0, %v390
    %v392 = vpop.f32.mrf.mxu0
    %393 = vdwg.mxu0
    %394 = vrot.lane.b32.xlu0 %v157, 96
    %v395 = vpop.permute.xlu0 %394
    %v396 = vsel %vm167, %v157, 0
    %v398 = vsel %vm167, %v395, 0
    %400 = vmatprep.subr.mxu0 0.0
    %401 = vmatpush1.xpose.msra.mxu0 0.0
    %402 = vmatprep.subr.mxu0 0.0
    %403 = vmatpush1.xpose.msra.mxu0 0.0
    %404 = vmatprep.subr.mxu0 0.0
    %405 = vmatpush1.xpose.msra.mxu0 0.0
    %406 = vmatprep.subr.mxu0 0.0
    %407 = vmatpush1.xpose.msra.mxu0 0.0
    %408 = vmatprep.subr.mxu0 0.0
    %409 = vmatpush1.xpose.msra.mxu0 0.0
    %410 = vmatprep.subr.mxu0 0.0
    %411 = vmatpush1.xpose.msra.mxu0 0.0
    %412 = vmatprep.subr.mxu0 0.0
    %413 = vmatpush1.xpose.msra.mxu0 0.0
    %414 = vmatprep.subr.mxu0 0.0
    %415 = vmatpush1.xpose.msra.mxu0 0.0
    %416 = vmatprep.subr.mxu0 0.0
    %417 = vmatpush1.xpose.msra.mxu0 0.0
    %418 = vmatprep.subr.mxu0 0.0
    %419 = vmatpush1.xpose.msra.mxu0 0.0
    %420 = vmatprep.subr.mxu0 0.0
    %421 = vmatpush1.xpose.msra.mxu0 0.0
    %422 = vmatprep.subr.mxu0 0.0
    %423 = vmatpush1.xpose.msra.mxu0 0.0
    %424 = vmatprep.subr.mxu0 0.0
    %425 = vmatpush1.xpose.msra.mxu0 0.0
    %426 = vmatprep.subr.mxu0 0.0
    %427 = vmatpush1.xpose.msra.mxu0 0.0
    %428 = vmatprep.subr.mxu0 0.0
    %429 = vmatpush1.xpose.msra.mxu0 0.0
    %430 = vmatprep.subr.mxu0 0.0
    %431 = vmatpush1.xpose.msra.mxu0 %v398
    %432 = vmatprep.subr.mxu0 0.0
    %433 = vmatpush2.xpose.msra.mxu0 0.0
    %434 = vmatprep.subr.mxu0 0.0
    %435 = vmatpush2.xpose.msra.mxu0 0.0
    %436 = vmatprep.subr.mxu0 0.0
    %437 = vmatpush2.xpose.msra.mxu0 0.0
    %438 = vmatprep.subr.mxu0 0.0
    %439 = vmatpush2.xpose.msra.mxu0 0.0
    %440 = vmatprep.subr.mxu0 0.0
    %441 = vmatpush2.xpose.msra.mxu0 0.0
    %442 = vmatprep.subr.mxu0 0.0
    %443 = vmatpush2.xpose.msra.mxu0 0.0
    %444 = vmatprep.subr.mxu0 0.0
    %445 = vmatpush2.xpose.msra.mxu0 0.0
    %446 = vmatprep.subr.mxu0 0.0
    %447 = vmatpush2.xpose.msra.mxu0 0.0
    %448 = vmatprep.subr.mxu0 0.0
    %449 = vmatpush2.xpose.msra.mxu0 0.0
    %450 = vmatprep.subr.mxu0 0.0
    %451 = vmatpush2.xpose.msra.mxu0 0.0
    %452 = vmatprep.subr.mxu0 0.0
    %453 = vmatpush2.xpose.msra.mxu0 0.0
    %454 = vmatprep.subr.mxu0 0.0
    %455 = vmatpush2.xpose.msra.mxu0 0.0
    %456 = vmatprep.subr.mxu0 0.0
    %457 = vmatpush2.xpose.msra.mxu0 0.0
    %458 = vmatprep.subr.mxu0 0.0
    %459 = vmatpush2.xpose.msra.mxu0 0.0
    %460 = vmatprep.subr.mxu0 0.0
    %461 = vmatpush2.xpose.msra.mxu0 0.0
    %462 = vmatprep.subr.mxu0 0.0
    %463 = vmatpush2.xpose.msra.mxu0 0.0
    %464 = vmatprep.mubr.f32.mxu0 0.0
    %465 = vmatmul.mubr.f32.gmra.mxu0 %v396
    %v466 = vpop.f32.mrf.mxu0
    %v467 = vadd.f32 0.0, %v466
    %v468 = vpop.f32.mrf.mxu0
    %469 = vdwg.mxu0
    %470 = vrot.lane.b32.xlu0 %v148, 96
    %v471 = vpop.permute.xlu0 %470
    %v472 = vsel %vm167, %v148, 0
    %v474 = vsel %vm167, %v471, 0
    %476 = vmatprep.subr.mxu0 0.0
    %477 = vmatpush1.xpose.msra.mxu0 0.0
    %478 = vmatprep.subr.mxu0 0.0
    %479 = vmatpush1.xpose.msra.mxu0 0.0
    %480 = vmatprep.subr.mxu0 0.0
    %481 = vmatpush1.xpose.msra.mxu0 0.0
    %482 = vmatprep.subr.mxu0 0.0
    %483 = vmatpush1.xpose.msra.mxu0 0.0
    %484 = vmatprep.subr.mxu0 0.0
    %485 = vmatpush1.xpose.msra.mxu0 0.0
    %486 = vmatprep.subr.mxu0 0.0
    %487 = vmatpush1.xpose.msra.mxu0 0.0
    %488 = vmatprep.subr.mxu0 0.0
    %489 = vmatpush1.xpose.msra.mxu0 0.0
    %490 = vmatprep.subr.mxu0 0.0
    %491 = vmatpush1.xpose.msra.mxu0 0.0
    %492 = vmatprep.subr.mxu0 0.0
    %493 = vmatpush1.xpose.msra.mxu0 0.0
    %494 = vmatprep.subr.mxu0 0.0
    %495 = vmatpush1.xpose.msra.mxu0 0.0
    %496 = vmatprep.subr.mxu0 0.0
    %497 = vmatpush1.xpose.msra.mxu0 0.0
    %498 = vmatprep.subr.mxu0 0.0
    %499 = vmatpush1.xpose.msra.mxu0 0.0
    %500 = vmatprep.subr.mxu0 0.0
    %501 = vmatpush1.xpose.msra.mxu0 0.0
    %502 = vmatprep.subr.mxu0 0.0
    %503 = vmatpush1.xpose.msra.mxu0 0.0
    %504 = vmatprep.subr.mxu0 0.0
    %505 = vmatpush1.xpose.msra.mxu0 0.0
    %506 = vmatprep.subr.mxu0 0.0
    %507 = vmatpush1.xpose.msra.mxu0 %v474
    %508 = vmatprep.subr.mxu0 0.0
    %509 = vmatpush2.xpose.msra.mxu0 0.0
    %510 = vmatprep.subr.mxu0 0.0
    %511 = vmatpush2.xpose.msra.mxu0 0.0
    %512 = vmatprep.subr.mxu0 0.0
    %513 = vmatpush2.xpose.msra.mxu0 0.0
    %514 = vmatprep.subr.mxu0 0.0
    %515 = vmatpush2.xpose.msra.mxu0 0.0
    %516 = vmatprep.subr.mxu0 0.0
    %517 = vmatpush2.xpose.msra.mxu0 0.0
    %518 = vmatprep.subr.mxu0 0.0
    %519 = vmatpush2.xpose.msra.mxu0 0.0
    %520 = vmatprep.subr.mxu0 0.0
    %521 = vmatpush2.xpose.msra.mxu0 0.0
    %522 = vmatprep.subr.mxu0 0.0
    %523 = vmatpush2.xpose.msra.mxu0 0.0
    %524 = vmatprep.subr.mxu0 0.0
    %525 = vmatpush2.xpose.msra.mxu0 0.0
    %526 = vmatprep.subr.mxu0 0.0
    %527 = vmatpush2.xpose.msra.mxu0 0.0
    %528 = vmatprep.subr.mxu0 0.0
    %529 = vmatpush2.xpose.msra.mxu0 0.0
    %530 = vmatprep.subr.mxu0 0.0
    %531 = vmatpush2.xpose.msra.mxu0 0.0
    %532 = vmatprep.subr.mxu0 0.0
    %533 = vmatpush2.xpose.msra.mxu0 0.0
    %534 = vmatprep.subr.mxu0 0.0
    %535 = vmatpush2.xpose.msra.mxu0 0.0
    %536 = vmatprep.subr.mxu0 0.0
    %537 = vmatpush2.xpose.msra.mxu0 0.0
    %538 = vmatprep.subr.mxu0 0.0
    %539 = vmatpush2.xpose.msra.mxu0 0.0
    %540 = vmatprep.mubr.f32.mxu0 0.0
    %541 = vmatmul.mubr.f32.gmra.mxu0 %v472
    %v542 = vpop.f32.mrf.mxu0
    %v543 = vadd.f32 0.0, %v542
    %v544 = vpop.f32.mrf.mxu0
    %545 = vdwg.mxu0
    %546 = vrot.lane.b32.xlu0 %v160, 96
    %v547 = vpop.permute.xlu0 %546
    %v548 = vsel %vm167, %v160, 0
    %v550 = vsel %vm167, %v547, 0
    %552 = vmatprep.subr.mxu0 0.0
    %553 = vmatpush1.xpose.msra.mxu0 0.0
    %554 = vmatprep.subr.mxu0 0.0
    %555 = vmatpush1.xpose.msra.mxu0 0.0
    %556 = vmatprep.subr.mxu0 0.0
    %557 = vmatpush1.xpose.msra.mxu0 0.0
    %558 = vmatprep.subr.mxu0 0.0
    %559 = vmatpush1.xpose.msra.mxu0 0.0
    %560 = vmatprep.subr.mxu0 0.0
    %561 = vmatpush1.xpose.msra.mxu0 0.0
    %562 = vmatprep.subr.mxu0 0.0
    %563 = vmatpush1.xpose.msra.mxu0 0.0
    %564 = vmatprep.subr.mxu0 0.0
    %565 = vmatpush1.xpose.msra.mxu0 0.0
    %566 = vmatprep.subr.mxu0 0.0
    %567 = vmatpush1.xpose.msra.mxu0 0.0
    %568 = vmatprep.subr.mxu0 0.0
    %569 = vmatpush1.xpose.msra.mxu0 0.0
    %570 = vmatprep.subr.mxu0 0.0
    %571 = vmatpush1.xpose.msra.mxu0 0.0
    %572 = vmatprep.subr.mxu0 0.0
    %573 = vmatpush1.xpose.msra.mxu0 0.0
    %574 = vmatprep.subr.mxu0 0.0
    %575 = vmatpush1.xpose.msra.mxu0 0.0
    %576 = vmatprep.subr.mxu0 0.0
    %577 = vmatpush1.xpose.msra.mxu0 0.0
    %578 = vmatprep.subr.mxu0 0.0
    %579 = vmatpush1.xpose.msra.mxu0 0.0
    %580 = vmatprep.subr.mxu0 0.0
    %581 = vmatpush1.xpose.msra.mxu0 0.0
    %582 = vmatprep.subr.mxu0 0.0
    %583 = vmatpush1.xpose.msra.mxu0 %v550
    %584 = vmatprep.subr.mxu0 0.0
    %585 = vmatpush2.xpose.msra.mxu0 0.0
    %586 = vmatprep.subr.mxu0 0.0
    %587 = vmatpush2.xpose.msra.mxu0 0.0
    %588 = vmatprep.subr.mxu0 0.0
    %589 = vmatpush2.xpose.msra.mxu0 0.0
    %590 = vmatprep.subr.mxu0 0.0
    %591 = vmatpush2.xpose.msra.mxu0 0.0
    %592 = vmatprep.subr.mxu0 0.0
    %593 = vmatpush2.xpose.msra.mxu0 0.0
    %594 = vmatprep.subr.mxu0 0.0
    %595 = vmatpush2.xpose.msra.mxu0 0.0
    %596 = vmatprep.subr.mxu0 0.0
    %597 = vmatpush2.xpose.msra.mxu0 0.0
    %598 = vmatprep.subr.mxu0 0.0
    %599 = vmatpush2.xpose.msra.mxu0 0.0
    %600 = vmatprep.subr.mxu0 0.0
    %601 = vmatpush2.xpose.msra.mxu0 0.0
    %602 = vmatprep.subr.mxu0 0.0
    %603 = vmatpush2.xpose.msra.mxu0 0.0
    %604 = vmatprep.subr.mxu0 0.0
    %605 = vmatpush2.xpose.msra.mxu0 0.0
    %606 = vmatprep.subr.mxu0 0.0
    %607 = vmatpush2.xpose.msra.mxu0 0.0
    %608 = vmatprep.subr.mxu0 0.0
    %609 = vmatpush2.xpose.msra.mxu0 0.0
    %610 = vmatprep.subr.mxu0 0.0
    %611 = vmatpush2.xpose.msra.mxu0 0.0
    %612 = vmatprep.subr.mxu0 0.0
    %613 = vmatpush2.xpose.msra.mxu0 0.0
    %614 = vmatprep.subr.mxu0 0.0
    %615 = vmatpush2.xpose.msra.mxu0 0.0
    %616 = vmatprep.mubr.f32.mxu0 0.0
    %617 = vmatmul.mubr.f32.gmra.mxu0 %v548
    %v618 = vpop.f32.mrf.mxu0
    %v619 = vadd.f32 0.0, %v618
    %v620 = vpop.f32.mrf.mxu0
    %621 = vdwg.mxu0
    %622 = vrot.lane.b32.xlu0 %v162, 96
    %v623 = vpop.permute.xlu0 %622
    %v624 = vsel %vm167, %v162, 0
    %v626 = vsel %vm167, %v623, 0
    %628 = vmatprep.subr.mxu0 0.0
    %629 = vmatpush1.xpose.msra.mxu0 0.0
    %630 = vmatprep.subr.mxu0 0.0
    %631 = vmatpush1.xpose.msra.mxu0 0.0
    %632 = vmatprep.subr.mxu0 0.0
    %633 = vmatpush1.xpose.msra.mxu0 0.0
    %634 = vmatprep.subr.mxu0 0.0
    %635 = vmatpush1.xpose.msra.mxu0 0.0
    %636 = vmatprep.subr.mxu0 0.0
    %637 = vmatpush1.xpose.msra.mxu0 0.0
    %638 = vmatprep.subr.mxu0 0.0
    %639 = vmatpush1.xpose.msra.mxu0 0.0
    %640 = vmatprep.subr.mxu0 0.0
    %641 = vmatpush1.xpose.msra.mxu0 0.0
    %642 = vmatprep.subr.mxu0 0.0
    %643 = vmatpush1.xpose.msra.mxu0 0.0
    %644 = vmatprep.subr.mxu0 0.0
    %645 = vmatpush1.xpose.msra.mxu0 0.0
    %646 = vmatprep.subr.mxu0 0.0
    %647 = vmatpush1.xpose.msra.mxu0 0.0
    %648 = vmatprep.subr.mxu0 0.0
    %649 = vmatpush1.xpose.msra.mxu0 0.0
    %650 = vmatprep.subr.mxu0 0.0
    %651 = vmatpush1.xpose.msra.mxu0 0.0
    %652 = vmatprep.subr.mxu0 0.0
    %653 = vmatpush1.xpose.msra.mxu0 0.0
    %654 = vmatprep.subr.mxu0 0.0
    %655 = vmatpush1.xpose.msra.mxu0 0.0
    %656 = vmatprep.subr.mxu0 0.0
    %657 = vmatpush1.xpose.msra.mxu0 0.0
    %658 = vmatprep.subr.mxu0 0.0
    %659 = vmatpush1.xpose.msra.mxu0 %v626
    %660 = vmatprep.subr.mxu0 0.0
    %661 = vmatpush2.xpose.msra.mxu0 0.0
    %662 = vmatprep.subr.mxu0 0.0
    %663 = vmatpush2.xpose.msra.mxu0 0.0
    %664 = vmatprep.subr.mxu0 0.0
    %665 = vmatpush2.xpose.msra.mxu0 0.0
    %666 = vmatprep.subr.mxu0 0.0
    %667 = vmatpush2.xpose.msra.mxu0 0.0
    %668 = vmatprep.subr.mxu0 0.0
    %669 = vmatpush2.xpose.msra.mxu0 0.0
    %670 = vmatprep.subr.mxu0 0.0
    %671 = vmatpush2.xpose.msra.mxu0 0.0
    %672 = vmatprep.subr.mxu0 0.0
    %673 = vmatpush2.xpose.msra.mxu0 0.0
    %674 = vmatprep.subr.mxu0 0.0
    %675 = vmatpush2.xpose.msra.mxu0 0.0
    %676 = vmatprep.subr.mxu0 0.0
    %677 = vmatpush2.xpose.msra.mxu0 0.0
    %678 = vmatprep.subr.mxu0 0.0
    %679 = vmatpush2.xpose.msra.mxu0 0.0
    %680 = vmatprep.subr.mxu0 0.0
    %681 = vmatpush2.xpose.msra.mxu0 0.0
    %682 = vmatprep.subr.mxu0 0.0
    %683 = vmatpush2.xpose.msra.mxu0 0.0
    %684 = vmatprep.subr.mxu0 0.0
    %685 = vmatpush2.xpose.msra.mxu0 0.0
    %686 = vmatprep.subr.mxu0 0.0
    %687 = vmatpush2.xpose.msra.mxu0 0.0
    %688 = vmatprep.subr.mxu0 0.0
    %689 = vmatpush2.xpose.msra.mxu0 0.0
    %690 = vmatprep.subr.mxu0 0.0
    %691 = vmatpush2.xpose.msra.mxu0 0.0
    %692 = vmatprep.mubr.f32.mxu0 0.0
    %693 = vmatmul.mubr.f32.gmra.mxu0 %v624
    %v694 = vpop.f32.mrf.mxu0
    %v695 = vadd.f32 0.0, %v694
    %v696 = vpop.f32.mrf.mxu0
    %697 = vdwg.mxu0
    %698 = vrot.lane.b32.xlu0 %v164, 96
    %v699 = vpop.permute.xlu0 %698
    %v700 = vsel %vm167, %v164, 0
    %v702 = vsel %vm167, %v699, 0
    %704 = vmatprep.subr.mxu0 0.0
    %705 = vmatpush1.xpose.msra.mxu0 0.0
    %706 = vmatprep.subr.mxu0 0.0
    %707 = vmatpush1.xpose.msra.mxu0 0.0
    %708 = vmatprep.subr.mxu0 0.0
    %709 = vmatpush1.xpose.msra.mxu0 0.0
    %710 = vmatprep.subr.mxu0 0.0
    %711 = vmatpush1.xpose.msra.mxu0 0.0
    %712 = vmatprep.subr.mxu0 0.0
    %713 = vmatpush1.xpose.msra.mxu0 0.0
    %714 = vmatprep.subr.mxu0 0.0
    %715 = vmatpush1.xpose.msra.mxu0 0.0
    %716 = vmatprep.subr.mxu0 0.0
    %717 = vmatpush1.xpose.msra.mxu0 0.0
    %718 = vmatprep.subr.mxu0 0.0
    %719 = vmatpush1.xpose.msra.mxu0 0.0
    %720 = vmatprep.subr.mxu0 0.0
    %721 = vmatpush1.xpose.msra.mxu0 0.0
    %722 = vmatprep.subr.mxu0 0.0
    %723 = vmatpush1.xpose.msra.mxu0 0.0
    %724 = vmatprep.subr.mxu0 0.0
    %725 = vmatpush1.xpose.msra.mxu0 0.0
    %726 = vmatprep.subr.mxu0 0.0
    %727 = vmatpush1.xpose.msra.mxu0 0.0
    %728 = vmatprep.subr.mxu0 0.0
    %729 = vmatpush1.xpose.msra.mxu0 0.0
    %730 = vmatprep.subr.mxu0 0.0
    %731 = vmatpush1.xpose.msra.mxu0 0.0
    %732 = vmatprep.subr.mxu0 0.0
    %733 = vmatpush1.xpose.msra.mxu0 0.0
    %734 = vmatprep.subr.mxu0 0.0
    %735 = vmatpush1.xpose.msra.mxu0 %v702
    %736 = vmatprep.subr.mxu0 0.0
    %737 = vmatpush2.xpose.msra.mxu0 0.0
    %738 = vmatprep.subr.mxu0 0.0
    %739 = vmatpush2.xpose.msra.mxu0 0.0
    %740 = vmatprep.subr.mxu0 0.0
    %741 = vmatpush2.xpose.msra.mxu0 0.0
    %742 = vmatprep.subr.mxu0 0.0
    %743 = vmatpush2.xpose.msra.mxu0 0.0
    %744 = vmatprep.subr.mxu0 0.0
    %745 = vmatpush2.xpose.msra.mxu0 0.0
    %746 = vmatprep.subr.mxu0 0.0
    %747 = vmatpush2.xpose.msra.mxu0 0.0
    %748 = vmatprep.subr.mxu0 0.0
    %749 = vmatpush2.xpose.msra.mxu0 0.0
    %750 = vmatprep.subr.mxu0 0.0
    %751 = vmatpush2.xpose.msra.mxu0 0.0
    %752 = vmatprep.subr.mxu0 0.0
    %753 = vmatpush2.xpose.msra.mxu0 0.0
    %754 = vmatprep.subr.mxu0 0.0
    %755 = vmatpush2.xpose.msra.mxu0 0.0
    %756 = vmatprep.subr.mxu0 0.0
    %757 = vmatpush2.xpose.msra.mxu0 0.0
    %758 = vmatprep.subr.mxu0 0.0
    %759 = vmatpush2.xpose.msra.mxu0 0.0
    %760 = vmatprep.subr.mxu0 0.0
    %761 = vmatpush2.xpose.msra.mxu0 0.0
    %762 = vmatprep.subr.mxu0 0.0
    %763 = vmatpush2.xpose.msra.mxu0 0.0
    %764 = vmatprep.subr.mxu0 0.0
    %765 = vmatpush2.xpose.msra.mxu0 0.0
    %766 = vmatprep.subr.mxu0 0.0
    %767 = vmatpush2.xpose.msra.mxu0 0.0
    %768 = vmatprep.mubr.f32.mxu0 0.0
    %769 = vmatmul.mubr.f32.gmra.mxu0 %v700
    %v770 = vpop.f32.mrf.mxu0
    %v771 = vadd.f32 0.0, %v770
    %v772 = vpop.f32.mrf.mxu0
    %773 = vdwg.mxu0
    %v774 = vsel %vm167, %v239, -inf
    %775 = vmax.xlane.f32.xlu0 %v774
    %v776 = vpop.xlane.xlu0 %775
    %v777 = vsel %vm167, %v315, -inf
    %778 = vmax.xlane.f32.xlu0 %v777
    %v779 = vpop.xlane.xlu0 %778
    %v780 = vsel %vm167, %v391, -inf
    %781 = vmax.xlane.f32.xlu0 %v780
    %v782 = vpop.xlane.xlu0 %781
    %v783 = vsel %vm167, %v467, -inf
    %784 = vmax.xlane.f32.xlu0 %v783
    %v785 = vpop.xlane.xlu0 %784
    %v786 = vsel %vm167, %v543, -inf
    %787 = vmax.xlane.f32.xlu0 %v786
    %v788 = vpop.xlane.xlu0 %787
    %v789 = vsel %vm167, %v619, -inf
    %790 = vmax.xlane.f32.xlu0 %v789
    %v791 = vpop.xlane.xlu0 %790
    %v792 = vsel %vm167, %v695, -inf
    %793 = vmax.xlane.f32.xlu0 %v792
    %v794 = vpop.xlane.xlu0 %793
    %v795 = vsel %vm167, %v771, -inf
    %796 = vmax.xlane.f32.xlu0 %v795
    %v797 = vpop.xlane.xlu0 %796
    %v798 = vsub.f32 %v239, %v776
    %v799 = vsub.f32 %v315, %v779
    %v800 = vsub.f32 %v391, %v782
    %v801 = vsub.f32 %v467, %v785
    %v802 = vsub.f32 %v543, %v788
    %v803 = vsub.f32 %v619, %v791
    %v804 = vsub.f32 %v695, %v794
    %v805 = vsub.f32 %v771, %v797
    %v806 = vmul.f32 %v798, 1.442695
    %v807 = vpow.pop %v806
    %v808 = vmul.f32 %v799, 1.442695
    %v809 = vpow.pop %v808
    %v810 = vmul.f32 %v800, 1.442695
    %v811 = vpow.pop %v810
    %v812 = vmul.f32 %v801, 1.442695
    %v813 = vpow.pop %v812
    %v814 = vmul.f32 %v802, 1.442695
    %v815 = vpow.pop %v814
    %v816 = vmul.f32 %v803, 1.442695
    %v817 = vpow.pop %v816
    %v818 = vmul.f32 %v804, 1.442695
    %v819 = vpow.pop %v818
    %v820 = vmul.f32 %v805, 1.442695
    %v821 = vpow.pop %v820
    %v822 = vsel %vm167, %v807, 0.0
    %823 = vadd.xlane.f32.xlu0 %v822
    %v824 = vpop.xlane.xlu0 %823
    %v825 = vsel %vm167, %v809, 0.0
    %826 = vadd.xlane.f32.xlu0 %v825
    %v827 = vpop.xlane.xlu0 %826
    %v828 = vsel %vm167, %v811, 0.0
    %829 = vadd.xlane.f32.xlu0 %v828
    %v830 = vpop.xlane.xlu0 %829
    %v831 = vsel %vm167, %v813, 0.0
    %832 = vadd.xlane.f32.xlu0 %v831
    %v833 = vpop.xlane.xlu0 %832
    %v834 = vsel %vm167, %v815, 0.0
    %835 = vadd.xlane.f32.xlu0 %v834
    %v836 = vpop.xlane.xlu0 %835
    %v837 = vsel %vm167, %v817, 0.0
    %838 = vadd.xlane.f32.xlu0 %v837
    %v839 = vpop.xlane.xlu0 %838
    %v840 = vsel %vm167, %v819, 0.0
    %841 = vadd.xlane.f32.xlu0 %v840
    %v842 = vpop.xlane.xlu0 %841
    %v843 = vsel %vm167, %v821, 0.0
    %844 = vadd.xlane.f32.xlu0 %v843
    %v845 = vpop.xlane.xlu0 %844
    %v846 = vrcp.pop %v824
    %v847 = vrcp.pop %v827
    %v848 = vrcp.pop %v830
    %v849 = vrcp.pop %v833
    %v850 = vrcp.pop %v836
    %v851 = vrcp.pop %v839
    %v852 = vrcp.pop %v842
    %v853 = vrcp.pop %v845
    %v854 = vmul.f32 %v807, %v846
    %v855 = vmul.f32 %v809, %v847
    %v856 = vmul.f32 %v811, %v848
    %v857 = vmul.f32 %v813, %v849
    %v858 = vmul.f32 %v815, %v850
    %v859 = vmul.f32 %v817, %v851
    %v860 = vmul.f32 %v819, %v852
    %v861 = vmul.f32 %v821, %v853
    %862 = vrot.lane.b32.xlu0 %v143, 64
    %v863 = vpop.permute.xlu0 %862
    %v866 = vsel %vm167, %v854, 0
    %868 = vmatprep.subr.mxu0 0.0
    %869 = vmatpush1.msra.mxu0 0.0
    %870 = vmatprep.subr.mxu0 0.0
    %871 = vmatpush1.msra.mxu0 0.0
    %872 = vmatprep.subr.mxu0 0.0
    %873 = vmatpush1.msra.mxu0 0.0
    %874 = vmatprep.subr.mxu0 0.0
    %875 = vmatpush1.msra.mxu0 0.0
    %876 = vmatprep.subr.mxu0 0.0
    %877 = vmatpush1.msra.mxu0 0.0
    %878 = vmatprep.subr.mxu0 0.0
    %879 = vmatpush1.msra.mxu0 0.0
    %880 = vmatprep.subr.mxu0 0.0
    %881 = vmatpush1.msra.mxu0 0.0
    %882 = vmatprep.subr.mxu0 0.0
    %883 = vmatpush1.msra.mxu0 0.0
    %884 = vmatprep.subr.mxu0 0.0
    %885 = vmatpush1.msra.mxu0 0.0
    %886 = vmatprep.subr.mxu0 0.0
    %887 = vmatpush1.msra.mxu0 0.0
    %888 = vmatprep.subr.mxu0 0.0
    %889 = vmatpush1.msra.mxu0 0.0
    %890 = vmatprep.subr.mxu0 0.0
    %891 = vmatpush1.msra.mxu0 0.0
    %892 = vmatprep.subr.mxu0 0.0
    %893 = vmatpush1.msra.mxu0 0.0
    %894 = vmatprep.subr.mxu0 0.0
    %895 = vmatpush1.msra.mxu0 0.0
    %896 = vmatprep.subr.mxu0 0.0
    %897 = vmatpush1.msra.mxu0 0.0
    %898 = vmatprep.subr.mxu0 0.0
    %899 = vmatpush1.msra.mxu0 %v863
    %900 = vmatprep.subr.mxu0 0.0
    %901 = vmatpush2.msra.mxu0 0.0
    %902 = vmatprep.subr.mxu0 0.0
    %903 = vmatpush2.msra.mxu0 0.0
    %904 = vmatprep.subr.mxu0 0.0
    %905 = vmatpush2.msra.mxu0 0.0
    %906 = vmatprep.subr.mxu0 0.0
    %907 = vmatpush2.msra.mxu0 0.0
    %908 = vmatprep.subr.mxu0 0.0
    %909 = vmatpush2.msra.mxu0 0.0
    %910 = vmatprep.subr.mxu0 0.0
    %911 = vmatpush2.msra.mxu0 0.0
    %912 = vmatprep.subr.mxu0 0.0
    %913 = vmatpush2.msra.mxu0 0.0
    %914 = vmatprep.subr.mxu0 0.0
    %915 = vmatpush2.msra.mxu0 0.0
    %916 = vmatprep.subr.mxu0 0.0
    %917 = vmatpush2.msra.mxu0 0.0
    %918 = vmatprep.subr.mxu0 0.0
    %919 = vmatpush2.msra.mxu0 0.0
    %920 = vmatprep.subr.mxu0 0.0
    %921 = vmatpush2.msra.mxu0 0.0
    %922 = vmatprep.subr.mxu0 0.0
    %923 = vmatpush2.msra.mxu0 0.0
    %924 = vmatprep.subr.mxu0 0.0
    %925 = vmatpush2.msra.mxu0 0.0
    %926 = vmatprep.subr.mxu0 0.0
    %927 = vmatpush2.msra.mxu0 0.0
    %928 = vmatprep.subr.mxu0 0.0
    %929 = vmatpush2.msra.mxu0 0.0
    %930 = vmatprep.subr.mxu0 0.0
    %931 = vmatpush2.msra.mxu0 0.0
    %932 = vmatprep.mubr.f32.mxu0 0.0
    %933 = vmatmul.mubr.f32.gmra.mxu0 %v866
    %v934 = vpop.f32.mrf.mxu0
    %v935 = vadd.f32 0.0, %v934
    %v936 = vpop.f32.mrf.mxu0
    %937 = vdwg.mxu0
    %938 = vrot.lane.b32.xlu0 %v153, 64
    %v939 = vpop.permute.xlu0 %938
    %v942 = vsel %vm167, %v855, 0
    %944 = vmatprep.subr.mxu0 0.0
    %945 = vmatpush1.msra.mxu0 0.0
    %946 = vmatprep.subr.mxu0 0.0
    %947 = vmatpush1.msra.mxu0 0.0
    %948 = vmatprep.subr.mxu0 0.0
    %949 = vmatpush1.msra.mxu0 0.0
    %950 = vmatprep.subr.mxu0 0.0
    %951 = vmatpush1.msra.mxu0 0.0
    %952 = vmatprep.subr.mxu0 0.0
    %953 = vmatpush1.msra.mxu0 0.0
    %954 = vmatprep.subr.mxu0 0.0
    %955 = vmatpush1.msra.mxu0 0.0
    %956 = vmatprep.subr.mxu0 0.0
    %957 = vmatpush1.msra.mxu0 0.0
    %958 = vmatprep.subr.mxu0 0.0
    %959 = vmatpush1.msra.mxu0 0.0
    %960 = vmatprep.subr.mxu0 0.0
    %961 = vmatpush1.msra.mxu0 0.0
    %962 = vmatprep.subr.mxu0 0.0
    %963 = vmatpush1.msra.mxu0 0.0
    %964 = vmatprep.subr.mxu0 0.0
    %965 = vmatpush1.msra.mxu0 0.0
    %966 = vmatprep.subr.mxu0 0.0
    %967 = vmatpush1.msra.mxu0 0.0
    %968 = vmatprep.subr.mxu0 0.0
    %969 = vmatpush1.msra.mxu0 0.0
    %970 = vmatprep.subr.mxu0 0.0
    %971 = vmatpush1.msra.mxu0 0.0
    %972 = vmatprep.subr.mxu0 0.0
    %973 = vmatpush1.msra.mxu0 0.0
    %974 = vmatprep.subr.mxu0 0.0
    %975 = vmatpush1.msra.mxu0 %v939
    %976 = vmatprep.subr.mxu0 0.0
    %977 = vmatpush2.msra.mxu0 0.0
    %978 = vmatprep.subr.mxu0 0.0
    %979 = vmatpush2.msra.mxu0 0.0
    %980 = vmatprep.subr.mxu0 0.0
    %981 = vmatpush2.msra.mxu0 0.0
    %982 = vmatprep.subr.mxu0 0.0
    %983 = vmatpush2.msra.mxu0 0.0
    %984 = vmatprep.subr.mxu0 0.0
    %985 = vmatpush2.msra.mxu0 0.0
    %986 = vmatprep.subr.mxu0 0.0
    %987 = vmatpush2.msra.mxu0 0.0
    %988 = vmatprep.subr.mxu0 0.0
    %989 = vmatpush2.msra.mxu0 0.0
    %990 = vmatprep.subr.mxu0 0.0
    %991 = vmatpush2.msra.mxu0 0.0
    %992 = vmatprep.subr.mxu0 0.0
    %993 = vmatpush2.msra.mxu0 0.0
    %994 = vmatprep.subr.mxu0 0.0
    %995 = vmatpush2.msra.mxu0 0.0
    %996 = vmatprep.subr.mxu0 0.0
    %997 = vmatpush2.msra.mxu0 0.0
    %998 = vmatprep.subr.mxu0 0.0
    %999 = vmatpush2.msra.mxu0 0.0
    %1000 = vmatprep.subr.mxu0 0.0
    %1001 = vmatpush2.msra.mxu0 0.0
    %1002 = vmatprep.subr.mxu0 0.0
    %1003 = vmatpush2.msra.mxu0 0.0
    %1004 = vmatprep.subr.mxu0 0.0
    %1005 = vmatpush2.msra.mxu0 0.0
    %1006 = vmatprep.subr.mxu0 0.0
    %1007 = vmatpush2.msra.mxu0 0.0
    %1008 = vmatprep.mubr.f32.mxu0 0.0
    %1009 = vmatmul.mubr.f32.gmra.mxu0 %v942
    %v1010 = vpop.f32.mrf.mxu0
    %v1011 = vadd.f32 0.0, %v1010
    %v1012 = vpop.f32.mrf.mxu0
    %1013 = vdwg.mxu0
    %1014 = vrot.lane.b32.xlu0 %v155, 64
    %v1015 = vpop.permute.xlu0 %1014
    %v1018 = vsel %vm167, %v856, 0
    %1020 = vmatprep.subr.mxu0 0.0
    %1021 = vmatpush1.msra.mxu0 0.0
    %1022 = vmatprep.subr.mxu0 0.0
    %1023 = vmatpush1.msra.mxu0 0.0
    %1024 = vmatprep.subr.mxu0 0.0
    %1025 = vmatpush1.msra.mxu0 0.0
    %1026 = vmatprep.subr.mxu0 0.0
    %1027 = vmatpush1.msra.mxu0 0.0
    %1028 = vmatprep.subr.mxu0 0.0
    %1029 = vmatpush1.msra.mxu0 0.0
    %1030 = vmatprep.subr.mxu0 0.0
    %1031 = vmatpush1.msra.mxu0 0.0
    %1032 = vmatprep.subr.mxu0 0.0
    %1033 = vmatpush1.msra.mxu0 0.0
    %1034 = vmatprep.subr.mxu0 0.0
    %1035 = vmatpush1.msra.mxu0 0.0
    %1036 = vmatprep.subr.mxu0 0.0
    %1037 = vmatpush1.msra.mxu0 0.0
    %1038 = vmatprep.subr.mxu0 0.0
    %1039 = vmatpush1.msra.mxu0 0.0
    %1040 = vmatprep.subr.mxu0 0.0
    %1041 = vmatpush1.msra.mxu0 0.0
    %1042 = vmatprep.subr.mxu0 0.0
    %1043 = vmatpush1.msra.mxu0 0.0
    %1044 = vmatprep.subr.mxu0 0.0
    %1045 = vmatpush1.msra.mxu0 0.0
    %1046 = vmatprep.subr.mxu0 0.0
    %1047 = vmatpush1.msra.mxu0 0.0
    %1048 = vmatprep.subr.mxu0 0.0
    %1049 = vmatpush1.msra.mxu0 0.0
    %1050 = vmatprep.subr.mxu0 0.0
    %1051 = vmatpush1.msra.mxu0 %v1015
    %1052 = vmatprep.subr.mxu0 0.0
    %1053 = vmatpush2.msra.mxu0 0.0
    %1054 = vmatprep.subr.mxu0 0.0
    %1055 = vmatpush2.msra.mxu0 0.0
    %1056 = vmatprep.subr.mxu0 0.0
    %1057 = vmatpush2.msra.mxu0 0.0
    %1058 = vmatprep.subr.mxu0 0.0
    %1059 = vmatpush2.msra.mxu0 0.0
    %1060 = vmatprep.subr.mxu0 0.0
    %1061 = vmatpush2.msra.mxu0 0.0
    %1062 = vmatprep.subr.mxu0 0.0
    %1063 = vmatpush2.msra.mxu0 0.0
    %1064 = vmatprep.subr.mxu0 0.0
    %1065 = vmatpush2.msra.mxu0 0.0
    %1066 = vmatprep.subr.mxu0 0.0
    %1067 = vmatpush2.msra.mxu0 0.0
    %1068 = vmatprep.subr.mxu0 0.0
    %1069 = vmatpush2.msra.mxu0 0.0
    %1070 = vmatprep.subr.mxu0 0.0
    %1071 = vmatpush2.msra.mxu0 0.0
    %1072 = vmatprep.subr.mxu0 0.0
    %1073 = vmatpush2.msra.mxu0 0.0
    %1074 = vmatprep.subr.mxu0 0.0
    %1075 = vmatpush2.msra.mxu0 0.0
    %1076 = vmatprep.subr.mxu0 0.0
    %1077 = vmatpush2.msra.mxu0 0.0
    %1078 = vmatprep.subr.mxu0 0.0
    %1079 = vmatpush2.msra.mxu0 0.0
    %1080 = vmatprep.subr.mxu0 0.0
    %1081 = vmatpush2.msra.mxu0 0.0
    %1082 = vmatprep.subr.mxu0 0.0
    %1083 = vmatpush2.msra.mxu0 0.0
    %1084 = vmatprep.mubr.f32.mxu0 0.0
    %1085 = vmatmul.mubr.f32.gmra.mxu0 %v1018
    %v1086 = vpop.f32.mrf.mxu0
    %v1087 = vadd.f32 0.0, %v1086
    %v1088 = vpop.f32.mrf.mxu0
    %1089 = vdwg.mxu0
    %1090 = vrot.lane.b32.xlu0 %v157, 64
    %v1091 = vpop.permute.xlu0 %1090
    %v1094 = vsel %vm167, %v857, 0
    %1096 = vmatprep.subr.mxu0 0.0
    %1097 = vmatpush1.msra.mxu0 0.0
    %1098 = vmatprep.subr.mxu0 0.0
    %1099 = vmatpush1.msra.mxu0 0.0
    %1100 = vmatprep.subr.mxu0 0.0
    %1101 = vmatpush1.msra.mxu0 0.0
    %1102 = vmatprep.subr.mxu0 0.0
    %1103 = vmatpush1.msra.mxu0 0.0
    %1104 = vmatprep.subr.mxu0 0.0
    %1105 = vmatpush1.msra.mxu0 0.0
    %1106 = vmatprep.subr.mxu0 0.0
    %1107 = vmatpush1.msra.mxu0 0.0
    %1108 = vmatprep.subr.mxu0 0.0
    %1109 = vmatpush1.msra.mxu0 0.0
    %1110 = vmatprep.subr.mxu0 0.0
    %1111 = vmatpush1.msra.mxu0 0.0
    %1112 = vmatprep.subr.mxu0 0.0
    %1113 = vmatpush1.msra.mxu0 0.0
    %1114 = vmatprep.subr.mxu0 0.0
    %1115 = vmatpush1.msra.mxu0 0.0
    %1116 = vmatprep.subr.mxu0 0.0
    %1117 = vmatpush1.msra.mxu0 0.0
    %1118 = vmatprep.subr.mxu0 0.0
    %1119 = vmatpush1.msra.mxu0 0.0
    %1120 = vmatprep.subr.mxu0 0.0
    %1121 = vmatpush1.msra.mxu0 0.0
    %1122 = vmatprep.subr.mxu0 0.0
    %1123 = vmatpush1.msra.mxu0 0.0
    %1124 = vmatprep.subr.mxu0 0.0
    %1125 = vmatpush1.msra.mxu0 0.0
    %1126 = vmatprep.subr.mxu0 0.0
    %1127 = vmatpush1.msra.mxu0 %v1091
    %1128 = vmatprep.subr.mxu0 0.0
    %1129 = vmatpush2.msra.mxu0 0.0
    %1130 = vmatprep.subr.mxu0 0.0
    %1131 = vmatpush2.msra.mxu0 0.0
    %1132 = vmatprep.subr.mxu0 0.0
    %1133 = vmatpush2.msra.mxu0 0.0
    %1134 = vmatprep.subr.mxu0 0.0
    %1135 = vmatpush2.msra.mxu0 0.0
    %1136 = vmatprep.subr.mxu0 0.0
    %1137 = vmatpush2.msra.mxu0 0.0
    %1138 = vmatprep.subr.mxu0 0.0
    %1139 = vmatpush2.msra.mxu0 0.0
    %1140 = vmatprep.subr.mxu0 0.0
    %1141 = vmatpush2.msra.mxu0 0.0
    %1142 = vmatprep.subr.mxu0 0.0
    %1143 = vmatpush2.msra.mxu0 0.0
    %1144 = vmatprep.subr.mxu0 0.0
    %1145 = vmatpush2.msra.mxu0 0.0
    %1146 = vmatprep.subr.mxu0 0.0
    %1147 = vmatpush2.msra.mxu0 0.0
    %1148 = vmatprep.subr.mxu0 0.0
    %1149 = vmatpush2.msra.mxu0 0.0
    %1150 = vmatprep.subr.mxu0 0.0
    %1151 = vmatpush2.msra.mxu0 0.0
    %1152 = vmatprep.subr.mxu0 0.0
    %1153 = vmatpush2.msra.mxu0 0.0
    %1154 = vmatprep.subr.mxu0 0.0
    %1155 = vmatpush2.msra.mxu0 0.0
    %1156 = vmatprep.subr.mxu0 0.0
    %1157 = vmatpush2.msra.mxu0 0.0
    %1158 = vmatprep.subr.mxu0 0.0
    %1159 = vmatpush2.msra.mxu0 0.0
    %1160 = vmatprep.mubr.f32.mxu0 0.0
    %1161 = vmatmul.mubr.f32.gmra.mxu0 %v1094
    %v1162 = vpop.f32.mrf.mxu0
    %v1163 = vadd.f32 0.0, %v1162
    %v1164 = vpop.f32.mrf.mxu0
    %1165 = vdwg.mxu0
    %1166 = vrot.lane.b32.xlu0 %v148, 64
    %v1167 = vpop.permute.xlu0 %1166
    %v1170 = vsel %vm167, %v858, 0
    %1172 = vmatprep.subr.mxu0 0.0
    %1173 = vmatpush1.msra.mxu0 0.0
    %1174 = vmatprep.subr.mxu0 0.0
    %1175 = vmatpush1.msra.mxu0 0.0
    %1176 = vmatprep.subr.mxu0 0.0
    %1177 = vmatpush1.msra.mxu0 0.0
    %1178 = vmatprep.subr.mxu0 0.0
    %1179 = vmatpush1.msra.mxu0 0.0
    %1180 = vmatprep.subr.mxu0 0.0
    %1181 = vmatpush1.msra.mxu0 0.0
    %1182 = vmatprep.subr.mxu0 0.0
    %1183 = vmatpush1.msra.mxu0 0.0
    %1184 = vmatprep.subr.mxu0 0.0
    %1185 = vmatpush1.msra.mxu0 0.0
    %1186 = vmatprep.subr.mxu0 0.0
    %1187 = vmatpush1.msra.mxu0 0.0
    %1188 = vmatprep.subr.mxu0 0.0
    %1189 = vmatpush1.msra.mxu0 0.0
    %1190 = vmatprep.subr.mxu0 0.0
    %1191 = vmatpush1.msra.mxu0 0.0
    %1192 = vmatprep.subr.mxu0 0.0
    %1193 = vmatpush1.msra.mxu0 0.0
    %1194 = vmatprep.subr.mxu0 0.0
    %1195 = vmatpush1.msra.mxu0 0.0
    %1196 = vmatprep.subr.mxu0 0.0
    %1197 = vmatpush1.msra.mxu0 0.0
    %1198 = vmatprep.subr.mxu0 0.0
    %1199 = vmatpush1.msra.mxu0 0.0
    %1200 = vmatprep.subr.mxu0 0.0
    %1201 = vmatpush1.msra.mxu0 0.0
    %1202 = vmatprep.subr.mxu0 0.0
    %1203 = vmatpush1.msra.mxu0 %v1167
    %1204 = vmatprep.subr.mxu0 0.0
    %1205 = vmatpush2.msra.mxu0 0.0
    %1206 = vmatprep.subr.mxu0 0.0
    %1207 = vmatpush2.msra.mxu0 0.0
    %1208 = vmatprep.subr.mxu0 0.0
    %1209 = vmatpush2.msra.mxu0 0.0
    %1210 = vmatprep.subr.mxu0 0.0
    %1211 = vmatpush2.msra.mxu0 0.0
    %1212 = vmatprep.subr.mxu0 0.0
    %1213 = vmatpush2.msra.mxu0 0.0
    %1214 = vmatprep.subr.mxu0 0.0
    %1215 = vmatpush2.msra.mxu0 0.0
    %1216 = vmatprep.subr.mxu0 0.0
    %1217 = vmatpush2.msra.mxu0 0.0
    %1218 = vmatprep.subr.mxu0 0.0
    %1219 = vmatpush2.msra.mxu0 0.0
    %1220 = vmatprep.subr.mxu0 0.0
    %1221 = vmatpush2.msra.mxu0 0.0
    %1222 = vmatprep.subr.mxu0 0.0
    %1223 = vmatpush2.msra.mxu0 0.0
    %1224 = vmatprep.subr.mxu0 0.0
    %1225 = vmatpush2.msra.mxu0 0.0
    %1226 = vmatprep.subr.mxu0 0.0
    %1227 = vmatpush2.msra.mxu0 0.0
    %1228 = vmatprep.subr.mxu0 0.0
    %1229 = vmatpush2.msra.mxu0 0.0
    %1230 = vmatprep.subr.mxu0 0.0
    %1231 = vmatpush2.msra.mxu0 0.0
    %1232 = vmatprep.subr.mxu0 0.0
    %1233 = vmatpush2.msra.mxu0 0.0
    %1234 = vmatprep.subr.mxu0 0.0
    %1235 = vmatpush2.msra.mxu0 0.0
    %1236 = vmatprep.mubr.f32.mxu0 0.0
    %1237 = vmatmul.mubr.f32.gmra.mxu0 %v1170
    %v1238 = vpop.f32.mrf.mxu0
    %v1239 = vadd.f32 0.0, %v1238
    %v1240 = vpop.f32.mrf.mxu0
    %1241 = vdwg.mxu0
    %1242 = vrot.lane.b32.xlu0 %v160, 64
    %v1243 = vpop.permute.xlu0 %1242
    %v1246 = vsel %vm167, %v859, 0
    %1248 = vmatprep.subr.mxu0 0.0
    %1249 = vmatpush1.msra.mxu0 0.0
    %1250 = vmatprep.subr.mxu0 0.0
    %1251 = vmatpush1.msra.mxu0 0.0
    %1252 = vmatprep.subr.mxu0 0.0
    %1253 = vmatpush1.msra.mxu0 0.0
    %1254 = vmatprep.subr.mxu0 0.0
    %1255 = vmatpush1.msra.mxu0 0.0
    %1256 = vmatprep.subr.mxu0 0.0
    %1257 = vmatpush1.msra.mxu0 0.0
    %1258 = vmatprep.subr.mxu0 0.0
    %1259 = vmatpush1.msra.mxu0 0.0
    %1260 = vmatprep.subr.mxu0 0.0
    %1261 = vmatpush1.msra.mxu0 0.0
    %1262 = vmatprep.subr.mxu0 0.0
    %1263 = vmatpush1.msra.mxu0 0.0
    %1264 = vmatprep.subr.mxu0 0.0
    %1265 = vmatpush1.msra.mxu0 0.0
    %1266 = vmatprep.subr.mxu0 0.0
    %1267 = vmatpush1.msra.mxu0 0.0
    %1268 = vmatprep.subr.mxu0 0.0
    %1269 = vmatpush1.msra.mxu0 0.0
    %1270 = vmatprep.subr.mxu0 0.0
    %1271 = vmatpush1.msra.mxu0 0.0
    %1272 = vmatprep.subr.mxu0 0.0
    %1273 = vmatpush1.msra.mxu0 0.0
    %1274 = vmatprep.subr.mxu0 0.0
    %1275 = vmatpush1.msra.mxu0 0.0
    %1276 = vmatprep.subr.mxu0 0.0
    %1277 = vmatpush1.msra.mxu0 0.0
    %1278 = vmatprep.subr.mxu0 0.0
    %1279 = vmatpush1.msra.mxu0 %v1243
    %1280 = vmatprep.subr.mxu0 0.0
    %1281 = vmatpush2.msra.mxu0 0.0
    %1282 = vmatprep.subr.mxu0 0.0
    %1283 = vmatpush2.msra.mxu0 0.0
    %1284 = vmatprep.subr.mxu0 0.0
    %1285 = vmatpush2.msra.mxu0 0.0
    %1286 = vmatprep.subr.mxu0 0.0
    %1287 = vmatpush2.msra.mxu0 0.0
    %1288 = vmatprep.subr.mxu0 0.0
    %1289 = vmatpush2.msra.mxu0 0.0
    %1290 = vmatprep.subr.mxu0 0.0
    %1291 = vmatpush2.msra.mxu0 0.0
    %1292 = vmatprep.subr.mxu0 0.0
    %1293 = vmatpush2.msra.mxu0 0.0
    %1294 = vmatprep.subr.mxu0 0.0
    %1295 = vmatpush2.msra.mxu0 0.0
    %1296 = vmatprep.subr.mxu0 0.0
    %1297 = vmatpush2.msra.mxu0 0.0
    %1298 = vmatprep.subr.mxu0 0.0
    %1299 = vmatpush2.msra.mxu0 0.0
    %1300 = vmatprep.subr.mxu0 0.0
    %1301 = vmatpush2.msra.mxu0 0.0
    %1302 = vmatprep.subr.mxu0 0.0
    %1303 = vmatpush2.msra.mxu0 0.0
    %1304 = vmatprep.subr.mxu0 0.0
    %1305 = vmatpush2.msra.mxu0 0.0
    %1306 = vmatprep.subr.mxu0 0.0
    %1307 = vmatpush2.msra.mxu0 0.0
    %1308 = vmatprep.subr.mxu0 0.0
    %1309 = vmatpush2.msra.mxu0 0.0
    %1310 = vmatprep.subr.mxu0 0.0
    %1311 = vmatpush2.msra.mxu0 0.0
    %1312 = vmatprep.mubr.f32.mxu0 0.0
    %1313 = vmatmul.mubr.f32.gmra.mxu0 %v1246
    %v1314 = vpop.f32.mrf.mxu0
    %v1315 = vadd.f32 0.0, %v1314
    %v1316 = vpop.f32.mrf.mxu0
    %1317 = vdwg.mxu0
    %1318 = vrot.lane.b32.xlu0 %v162, 64
    %v1319 = vpop.permute.xlu0 %1318
    %v1322 = vsel %vm167, %v860, 0
    %1324 = vmatprep.subr.mxu0 0.0
    %1325 = vmatpush1.msra.mxu0 0.0
    %1326 = vmatprep.subr.mxu0 0.0
    %1327 = vmatpush1.msra.mxu0 0.0
    %1328 = vmatprep.subr.mxu0 0.0
    %1329 = vmatpush1.msra.mxu0 0.0
    %1330 = vmatprep.subr.mxu0 0.0
    %1331 = vmatpush1.msra.mxu0 0.0
    %1332 = vmatprep.subr.mxu0 0.0
    %1333 = vmatpush1.msra.mxu0 0.0
    %1334 = vmatprep.subr.mxu0 0.0
    %1335 = vmatpush1.msra.mxu0 0.0
    %1336 = vmatprep.subr.mxu0 0.0
    %1337 = vmatpush1.msra.mxu0 0.0
    %1338 = vmatprep.subr.mxu0 0.0
    %1339 = vmatpush1.msra.mxu0 0.0
    %1340 = vmatprep.subr.mxu0 0.0
    %1341 = vmatpush1.msra.mxu0 0.0
    %1342 = vmatprep.subr.mxu0 0.0
    %1343 = vmatpush1.msra.mxu0 0.0
    %1344 = vmatprep.subr.mxu0 0.0
    %1345 = vmatpush1.msra.mxu0 0.0
    %1346 = vmatprep.subr.mxu0 0.0
    %1347 = vmatpush1.msra.mxu0 0.0
    %1348 = vmatprep.subr.mxu0 0.0
    %1349 = vmatpush1.msra.mxu0 0.0
    %1350 = vmatprep.subr.mxu0 0.0
    %1351 = vmatpush1.msra.mxu0 0.0
    %1352 = vmatprep.subr.mxu0 0.0
    %1353 = vmatpush1.msra.mxu0 0.0
    %1354 = vmatprep.subr.mxu0 0.0
    %1355 = vmatpush1.msra.mxu0 %v1319
    %1356 = vmatprep.subr.mxu0 0.0
    %1357 = vmatpush2.msra.mxu0 0.0
    %1358 = vmatprep.subr.mxu0 0.0
    %1359 = vmatpush2.msra.mxu0 0.0
    %1360 = vmatprep.subr.mxu0 0.0
    %1361 = vmatpush2.msra.mxu0 0.0
    %1362 = vmatprep.subr.mxu0 0.0
    %1363 = vmatpush2.msra.mxu0 0.0
    %1364 = vmatprep.subr.mxu0 0.0
    %1365 = vmatpush2.msra.mxu0 0.0
    %1366 = vmatprep.subr.mxu0 0.0
    %1367 = vmatpush2.msra.mxu0 0.0
    %1368 = vmatprep.subr.mxu0 0.0
    %1369 = vmatpush2.msra.mxu0 0.0
    %1370 = vmatprep.subr.mxu0 0.0
    %1371 = vmatpush2.msra.mxu0 0.0
    %1372 = vmatprep.subr.mxu0 0.0
    %1373 = vmatpush2.msra.mxu0 0.0
    %1374 = vmatprep.subr.mxu0 0.0
    %1375 = vmatpush2.msra.mxu0 0.0
    %1376 = vmatprep.subr.mxu0 0.0
    %1377 = vmatpush2.msra.mxu0 0.0
    %1378 = vmatprep.subr.mxu0 0.0
    %1379 = vmatpush2.msra.mxu0 0.0
    %1380 = vmatprep.subr.mxu0 0.0
    %1381 = vmatpush2.msra.mxu0 0.0
    %1382 = vmatprep.subr.mxu0 0.0
    %1383 = vmatpush2.msra.mxu0 0.0
    %1384 = vmatprep.subr.mxu0 0.0
    %1385 = vmatpush2.msra.mxu0 0.0
    %1386 = vmatprep.subr.mxu0 0.0
    %1387 = vmatpush2.msra.mxu0 0.0
    %1388 = vmatprep.mubr.f32.mxu0 0.0
    %1389 = vmatmul.mubr.f32.gmra.mxu0 %v1322
    %v1390 = vpop.f32.mrf.mxu0
    %v1391 = vadd.f32 0.0, %v1390
    %v1392 = vpop.f32.mrf.mxu0
    %1393 = vdwg.mxu0
    %1394 = vrot.lane.b32.xlu0 %v164, 64
    %v1395 = vpop.permute.xlu0 %1394
    %v1398 = vsel %vm167, %v861, 0
    %1400 = vmatprep.subr.mxu0 0.0
    %1401 = vmatpush1.msra.mxu0 0.0
    %1402 = vmatprep.subr.mxu0 0.0
    %1403 = vmatpush1.msra.mxu0 0.0
    %1404 = vmatprep.subr.mxu0 0.0
    %1405 = vmatpush1.msra.mxu0 0.0
    %1406 = vmatprep.subr.mxu0 0.0
    %1407 = vmatpush1.msra.mxu0 0.0
    %1408 = vmatprep.subr.mxu0 0.0
    %1409 = vmatpush1.msra.mxu0 0.0
    %1410 = vmatprep.subr.mxu0 0.0
    %1411 = vmatpush1.msra.mxu0 0.0
    %1412 = vmatprep.subr.mxu0 0.0
    %1413 = vmatpush1.msra.mxu0 0.0
    %1414 = vmatprep.subr.mxu0 0.0
    %1415 = vmatpush1.msra.mxu0 0.0
    %1416 = vmatprep.subr.mxu0 0.0
    %1417 = vmatpush1.msra.mxu0 0.0
    %1418 = vmatprep.subr.mxu0 0.0
    %1419 = vmatpush1.msra.mxu0 0.0
    %1420 = vmatprep.subr.mxu0 0.0
    %1421 = vmatpush1.msra.mxu0 0.0
    %1422 = vmatprep.subr.mxu0 0.0
    %1423 = vmatpush1.msra.mxu0 0.0
    %1424 = vmatprep.subr.mxu0 0.0
    %1425 = vmatpush1.msra.mxu0 0.0
    %1426 = vmatprep.subr.mxu0 0.0
    %1427 = vmatpush1.msra.mxu0 0.0
    %1428 = vmatprep.subr.mxu0 0.0
    %1429 = vmatpush1.msra.mxu0 0.0
    %1430 = vmatprep.subr.mxu0 0.0
    %1431 = vmatpush1.msra.mxu0 %v1395
    %1432 = vmatprep.subr.mxu0 0.0
    %1433 = vmatpush2.msra.mxu0 0.0
    %1434 = vmatprep.subr.mxu0 0.0
    %1435 = vmatpush2.msra.mxu0 0.0
    %1436 = vmatprep.subr.mxu0 0.0
    %1437 = vmatpush2.msra.mxu0 0.0
    %1438 = vmatprep.subr.mxu0 0.0
    %1439 = vmatpush2.msra.mxu0 0.0
    %1440 = vmatprep.subr.mxu0 0.0
    %1441 = vmatpush2.msra.mxu0 0.0
    %1442 = vmatprep.subr.mxu0 0.0
    %1443 = vmatpush2.msra.mxu0 0.0
    %1444 = vmatprep.subr.mxu0 0.0
    %1445 = vmatpush2.msra.mxu0 0.0
    %1446 = vmatprep.subr.mxu0 0.0
    %1447 = vmatpush2.msra.mxu0 0.0
    %1448 = vmatprep.subr.mxu0 0.0
    %1449 = vmatpush2.msra.mxu0 0.0
    %1450 = vmatprep.subr.mxu0 0.0
    %1451 = vmatpush2.msra.mxu0 0.0
    %1452 = vmatprep.subr.mxu0 0.0
    %1453 = vmatpush2.msra.mxu0 0.0
    %1454 = vmatprep.subr.mxu0 0.0
    %1455 = vmatpush2.msra.mxu0 0.0
    %1456 = vmatprep.subr.mxu0 0.0
    %1457 = vmatpush2.msra.mxu0 0.0
    %1458 = vmatprep.subr.mxu0 0.0
    %1459 = vmatpush2.msra.mxu0 0.0
    %1460 = vmatprep.subr.mxu0 0.0
    %1461 = vmatpush2.msra.mxu0 0.0
    %1462 = vmatprep.subr.mxu0 0.0
    %1463 = vmatpush2.msra.mxu0 0.0
    %1464 = vmatprep.mubr.f32.mxu0 0.0
    %1465 = vmatmul.mubr.f32.gmra.mxu0 %v1398
    %v1466 = vpop.f32.mrf.mxu0
    %v1467 = vadd.f32 0.0, %v1466
    %v1468 = vpop.f32.mrf.mxu0
    %1469 = vdwg.mxu0
    %1471 = vrot.lane.b32.xlu0 %v1011, 8
    %v1472 = vpop.permute.xlu0 %1471
    %1475 = vrot.lane.b32.xlu0 %v1087, 16
    %v1476 = vpop.permute.xlu0 %1475
    %1479 = vrot.lane.b32.xlu0 %v1163, 24
    %v1480 = vpop.permute.xlu0 %1479
    %v1482 = vsel %vm167, %v935, %v1472
    %vm1483 = vcmask 130048
    %v1484 = vsel %vm1483, %v1482, %v1476
    %vm1485 = vcmask 195584
    %v1486 = vsel %vm1485, %v1484, %v1480
    %1488 = vrot.lane.b32.xlu0 %v1315, 8
    %v1489 = vpop.permute.xlu0 %1488
    %1492 = vrot.lane.b32.xlu0 %v1391, 16
    %v1493 = vpop.permute.xlu0 %1492
    %1496 = vrot.lane.b32.xlu0 %v1467, 24
    %v1497 = vpop.permute.xlu0 %1496
    %v1499 = vsel %vm167, %v1239, %v1489
    %v1500 = vsel %vm1483, %v1499, %v1493
    %v1501 = vsel %vm1485, %v1500, %v1497
    %v1502 = vlaneseq
    %v1503 = vshrl.u32 %v1502, 7
    %v1504 = vsub.s32 1, %v1503
    %v1505 = vrot.slane %v64, %v1504
    %v1507 = vsel %vm69, %v1486, 0
    %v1510 = vsel %vm69, %v1501, 0
    %1512 = vmatprep.subr.mxu0 0.0
    %1513 = vmatpush1.msra.mxu0 0.0
    %1514 = vmatprep.subr.mxu0 0.0
    %1515 = vmatpush1.msra.mxu0 0.0
    %1516 = vmatprep.subr.mxu0 0.0
    %1517 = vmatpush1.msra.mxu0 0.0
    %1518 = vmatprep.subr.mxu0 0.0
    %1519 = vmatpush1.msra.mxu0 0.0
    %1520 = vmatprep.subr.mxu0 0.0
    %1521 = vmatpush1.msra.mxu0 0.0
    %1522 = vmatprep.subr.mxu0 0.0
    %1523 = vmatpush1.msra.mxu0 0.0
    %1524 = vmatprep.subr.mxu0 0.0
    %1525 = vmatpush1.msra.mxu0 0.0
    %1526 = vmatprep.subr.mxu0 0.0
    %1527 = vmatpush1.msra.mxu0 0.0
    %1528 = vmatprep.subr.mxu0 0.0
    %1529 = vmatpush1.msra.mxu0 0.0
    %1530 = vmatprep.subr.mxu0 0.0
    %1531 = vmatpush1.msra.mxu0 0.0
    %1532 = vmatprep.subr.mxu0 0.0
    %1533 = vmatpush1.msra.mxu0 0.0
    %1534 = vmatprep.subr.mxu0 0.0
    %1535 = vmatpush1.msra.mxu0 0.0
    %1536 = vmatprep.subr.mxu0 0.0
    %1537 = vmatpush1.msra.mxu0 %v63
    %1538 = vmatprep.subr.mxu0 0.0
    %1539 = vmatpush1.msra.mxu0 %v62
    %1540 = vmatprep.subr.mxu0 0.0
    %1541 = vmatpush1.msra.mxu0 %v61
    %1542 = vmatprep.subr.mxu0 0.0
    %1543 = vmatpush1.msra.mxu0 %v60
    %1544 = vmatprep.subr.mxu0 0.0
    %1545 = vmatpush2.msra.mxu0 0.0
    %1546 = vmatprep.subr.mxu0 0.0
    %1547 = vmatpush2.msra.mxu0 0.0
    %1548 = vmatprep.subr.mxu0 0.0
    %1549 = vmatpush2.msra.mxu0 0.0
    %1550 = vmatprep.subr.mxu0 0.0
    %1551 = vmatpush2.msra.mxu0 0.0
    %1552 = vmatprep.subr.mxu0 0.0
    %1553 = vmatpush2.msra.mxu0 0.0
    %1554 = vmatprep.subr.mxu0 0.0
    %1555 = vmatpush2.msra.mxu0 0.0
    %1556 = vmatprep.subr.mxu0 0.0
    %1557 = vmatpush2.msra.mxu0 0.0
    %1558 = vmatprep.subr.mxu0 0.0
    %1559 = vmatpush2.msra.mxu0 0.0
    %1560 = vmatprep.subr.mxu0 0.0
    %1561 = vmatpush2.msra.mxu0 0.0
    %1562 = vmatprep.subr.mxu0 0.0
    %1563 = vmatpush2.msra.mxu0 0.0
    %1564 = vmatprep.subr.mxu0 0.0
    %1565 = vmatpush2.msra.mxu0 0.0
    %1566 = vmatprep.subr.mxu0 0.0
    %1567 = vmatpush2.msra.mxu0 0.0
    %1568 = vmatprep.subr.mxu0 0.0
    %1569 = vmatpush2.msra.mxu0 0.0
    %1570 = vmatprep.subr.mxu0 0.0
    %1571 = vmatpush2.msra.mxu0 0.0
    %1572 = vmatprep.subr.mxu0 0.0
    %1573 = vmatpush2.msra.mxu0 0.0
    %1574 = vmatprep.subr.mxu0 0.0
    %1575 = vmatpush2.msra.mxu0 0.0
    %1576 = vmatprep.mubr.f32.mxu0 0.0
    %1577 = vmatmul.mubr.f32.gmra.mxu0 %v1507
    %v1578 = vpop.f32.mrf.mxu0
    %v1579 = vadd.f32 %v1505, %v1578
    %v1580 = vpop.f32.mrf.mxu0
    %1581 = vmatprep.mubr.f32.mxu0 0.0
    %1582 = vmatmul.mubr.f32.gmra.mxu0 %v1510
    %v1583 = vpop.f32.mrf.mxu0
    %v1584 = vadd.f32 %v1505, %v1583
    %v1585 = vpop.f32.mrf.mxu0
    %1586 = vdwg.mxu0
    %v1587 = vadd.f32 %v1579, %v54
    %v1588 = vadd.f32 %v1584, %v55
    %v1589 = vsel %vm69, %v1587, 0.0
    %1590 = vadd.xlane.f32.xlu0 %v1589
    %v1591 = vpop.xlane.xlu0 %1590
    %v1592 = vsel %vm69, %v1588, 0.0
    %1593 = vadd.xlane.f32.xlu0 %v1592
    %v1594 = vpop.xlane.xlu0 %1593
    %v1595 = vrcp.pop 32.0
    %v1596 = vmul.f32 %v1591, %v1595
    %v1597 = vmul.f32 %v1594, %v1595
    %v1598 = vsub.f32 %v1587, %v1596
    %v1599 = vsub.f32 %v1588, %v1597
    %v1600 = vmul.f32 %v1598, %v1598
    %v1601 = vmul.f32 %v1599, %v1599
    %v1602 = vsel %vm69, %v1600, 0.0
    %1603 = vadd.xlane.f32.xlu0 %v1602
    %v1604 = vpop.xlane.xlu0 %1603
    %v1605 = vsel %vm69, %v1601, 0.0
    %1606 = vadd.xlane.f32.xlu0 %v1605
    %v1607 = vpop.xlane.xlu0 %1606
    %v1608 = vmul.f32 %v1604, %v1595
    %v1609 = vmul.f32 %v1607, %v1595
    %v1610 = vadd.f32 %v1608, 1e-12
    %v1611 = vadd.f32 %v1609, 1e-12
    %v1612 = vrsqrt.pop %v1610
    %v1613 = vrsqrt.pop %v1611
    %v1614 = vmul.f32 %v1598, %v1612
    %v1615 = vmul.f32 %v1599, %v1613
    %v1616 = vlaneseq
    %v1617 = vshrl.u32 %v1616, 7
    %v1618 = vsub.s32 2, %v1617
    %v1619 = vrot.slane %v64, %v1618
    %v1620 = vmul.f32 %v1614, %v1619
    %v1621 = vmul.f32 %v1615, %v1619
    %v1622 = vlaneseq
    %v1623 = vshrl.u32 %v1622, 7
    %v1624 = vsub.s32 3, %v1623
    %v1625 = vrot.slane %v64, %v1624
    %v1626 = vadd.f32 %v1620, %v1625
    %v1627 = vadd.f32 %v1621, %v1625
    %1628 = vst.msk [vmem:[#allocation8] sm:$0xff] %vm69, %v1626
    %1629 = vst.msk [vmem:[#allocation8 + $0x8] sm:$0xff] %vm69, %v1627
    // Predicated region
    $region26: #{tpu_custom_call.1} parent=1 // pred_check
      _
    $region27: #{tpu_custom_call.1} parent=1 // pred_check_branch
      %1631 = sbr.rel (0) target = $region29
    $region28: #{tpu_custom_call.1} parent=1 // pred_region
      %s1633 = ssub.s32 256, 256
      %1634 = vsyncadd [#allocation4], %s1633
      %s1635 = sshll.u32 [#allocation8], 4
      %s1636 = int_to_ptr.vmem [resolvable:$true] %s1635
      %1641 = dma.vmem_to_hbm [thread:$0]  %s1636, 256, %s3, [#allocation4], 128, 128, 8
    $region29: #{tpu_custom_call.1} parent=1 // pred_fallthru
      _
    // Predicated region
    $region30: #{tpu_custom_call.1} parent=1 // pred_check
      _
    $region31: #{tpu_custom_call.1} parent=1 // pred_check_branch
      %1643 = sbr.rel (0) target = $region33
    $region32: #{tpu_custom_call.1} parent=1 // pred_region
      %1644 = dma.done [#allocation4], 256
    $region33: #{tpu_custom_call.1} parent=1 // pred_fallthru
      _
    %1645 = vsyncpa [#allocation3], 1
    %1646 = vsyncpa [#allocation6], 1
    %1647 = vsyncpa [#allocation4], 1

</llo_original>
